<compile_context>
chip_gen: v7x
topology: tpu7x:2x2x1
jax: 0.10.0
libtpu: 0.0.40
codegen_flags: <defaults>
</compile_context>

<pallas_src>
import jax
import jax.numpy as jnp
from jax.experimental import pallas as pl
from jax.experimental.pallas import tpu as pltpu

SUBLANE = 8     # vreg sublane count
LANE = 128      # vreg lane count — feature / class dims padded to this
TILE_B = 8      # batch rows per grid step (multiple of SUBLANE)


# -----------------------------------------------------------------------------
# Fused kernel
# -----------------------------------------------------------------------------

def fused_multimodal_kernel(cls_ids_ref,      # SMEM [b_pad] int32 (scalar prefetch)
                            img_ref,          # VMEM [TILE_B, C*HW] f32
                            w_img_enc_ref,    # VMEM [C*HW, LANE] f32 (GAP scale folded)
                            emb_proj_ref,     # HBM  [V, LANE] f32 (emb_table @ w_txt_enc)
                            w_cls_ref,        # VMEM [2*LANE, LANE] f32 (fusion-scaled, stacked)
                            b_ref,            # VMEM [SUBLANE, LANE] f32 (rows 0..2 used)
                            out_ref,          # VMEM [TILE_B, LANE] f32
                            txt_buf,          # VMEM scratch [TILE_B, LANE] f32
                            sem):             # DMA semaphores (TILE_B,)
    base = pl.program_id(0) * TILE_B

    # ---- start per-row CLS embedding gathers (HBM -> VMEM); overlap with image matmul
    copies = []
    for i in range(TILE_B):
        row = cls_ids_ref[base + i]
        cp = pltpu.make_async_copy(emb_proj_ref.at[row], txt_buf.at[i], sem.at[i])
        cp.start()
        copies.append(cp)

    # ---- image path: GAP folded into a single [TILE_B, C*HW] x [C*HW, LANE] MXU matmul
    img_feat = jnp.tanh(
        jnp.dot(img_ref[...], w_img_enc_ref[...],
                preferred_element_type=jnp.float32) + b_ref[0:1, :])

    # ---- text path: gathered rows are already projected (emb @ w_txt_enc pre-fused)
    for cp in copies:
        cp.wait()
    txt_feat = jnp.tanh(txt_buf[...] + b_ref[1:2, :])

    # ---- merged classifier + fusion: one K=256 matmul, fusion weights folded into W/b
    feat = jnp.concatenate([img_feat, txt_feat], axis=-1)          # [TILE_B, 2*LANE]
    out_ref[...] = jnp.dot(feat, w_cls_ref[...],
                           preferred_element_type=jnp.float32) + b_ref[2:3, :]


# -----------------------------------------------------------------------------
# Host-side parameter construction / packing
# -----------------------------------------------------------------------------

def _pad2d(x, rows, cols):
    r, c = x.shape
    return jnp.pad(x, ((0, rows - r), (0, cols - c)))


def _pad1d(x, n):
    return jnp.pad(x, (0, n - x.shape[0]))


def init_params(key, *, vocab, emb_dim, text_hidden, img_channels,
                image_features, num_classes):
    """Logical parameters, shapes matching the PyTorch module's head."""
    ks = jax.random.split(key, 6)
    scale = 0.02
    return {
        # synthetic encoders (stand-ins for the pretrained backbones)
        "emb_table": scale * jax.random.normal(ks[0], (vocab, emb_dim), jnp.float32),
        "w_txt_enc": scale * jax.random.normal(ks[1], (emb_dim, text_hidden), jnp.float32),
        "b_txt_enc": jnp.zeros((text_hidden,), jnp.float32),
        "w_img_enc": scale * jax.random.normal(ks[2], (img_channels, image_features), jnp.float32),
        "b_img_enc": jnp.zeros((image_features,), jnp.float32),
        # MultiModalModel head
        "w_img_cls": scale * jax.random.normal(ks[3], (image_features, num_classes), jnp.float32),
        "b_img_cls": scale * jax.random.normal(ks[4], (num_classes,), jnp.float32),
        "w_txt_cls": scale * jax.random.normal(ks[5], (text_hidden, num_classes), jnp.float32),
        "b_txt_cls": jnp.zeros((num_classes,), jnp.float32),
        "fusion_weight": jnp.ones((2,), jnp.float32),
    }


def pack_params(params, *, spatial_size):
    """One-time host-side packing (inference): fold the GAP 1/(H*W) scale into a
    repeated [C*HW, 128] projection, pre-fuse the text projection into the
    embedding table, merge the two classifiers into one fusion-weight-scaled
    [256, 128] matrix, and pre-combine the classifier biases."""
    c = params["w_img_enc"].shape[0]
    num_classes = params["w_img_cls"].shape[1]
    fw = params["fusion_weight"]

    # GAP folded: each channel row repeated HW times, scaled by 1/HW.
    w_img_fold = jnp.repeat(params["w_img_enc"] / float(spatial_size),
                            spatial_size, axis=0)                       # [C*HW, F]
    # Text projection pre-fused (exact by matmul associativity).
    emb_proj = params["emb_table"] @ params["w_txt_enc"]                # [V, H]
    # Merged classifier with fusion weights folded in.
    w_cls = jnp.concatenate([
        fw[0] * _pad2d(params["w_img_cls"], LANE, LANE),
        fw[1] * _pad2d(params["w_txt_cls"], LANE, LANE)], axis=0)       # [256, 128]
    b_comb = (fw[0] * _pad1d(params["b_img_cls"], LANE)
              + fw[1] * _pad1d(params["b_txt_cls"], LANE))

    biases = jnp.zeros((SUBLANE, LANE), jnp.float32)
    biases = biases.at[0].set(_pad1d(params["b_img_enc"], LANE))
    biases = biases.at[1].set(_pad1d(params["b_txt_enc"], LANE))
    biases = biases.at[2].set(b_comb)

    return {
        "w_img_enc_p": _pad2d(w_img_fold, c * spatial_size, LANE),      # [C*HW, 128]
        "emb_proj_p": _pad2d(emb_proj, emb_proj.shape[0], LANE),        # [V, 128] (HBM)
        "w_cls_p": w_cls,                                               # [256, 128]
        "biases_p": biases,                                             # [8, 128]
        "num_classes": num_classes,
    }


# -----------------------------------------------------------------------------
# Forward wrapper
# -----------------------------------------------------------------------------

def multi_modal_forward(packed, text_input, attention_mask, image_input):
    # TODO(synk): attention_mask is unused — the pretrained text transformer is
    # replaced by a synthetic CLS-embedding encoder with no attention/masking.
    del attention_mask
    B, C, H, W = image_input.shape
    flat_dim = C * H * W
    b_pad = ((B + TILE_B - 1) // TILE_B) * TILE_B

    # TODO(synk): at large B handle the batch remainder with a masked tail store
    # instead of this jnp.pad HBM copy; at toy sizes it is noise.
    img_flat = image_input.reshape(B, flat_dim).astype(jnp.float32)
    img_flat = jnp.pad(img_flat, ((0, b_pad - B), (0, 0)))
    cls_ids = jnp.pad(text_input[:, 0].astype(jnp.int32), (0, b_pad - B))

    out_padded = pl.pallas_call(
        fused_multimodal_kernel,
        out_shape=jax.ShapeDtypeStruct((b_pad, LANE), jnp.float32),
        grid_spec=pltpu.PrefetchScalarGridSpec(
            num_scalar_prefetch=1,
            grid=(b_pad // TILE_B,),
            in_specs=[
                pl.BlockSpec((TILE_B, flat_dim), lambda t, ids: (t, 0)),
                pl.BlockSpec((flat_dim, LANE), lambda t, ids: (0, 0)),
                pl.BlockSpec(memory_space=pl.ANY),       # emb_proj stays in HBM
                pl.BlockSpec((2 * LANE, LANE), lambda t, ids: (0, 0)),
                pl.BlockSpec((SUBLANE, LANE), lambda t, ids: (0, 0)),
            ],
            out_specs=pl.BlockSpec((TILE_B, LANE), lambda t, ids: (t, 0)),
            scratch_shapes=[
                pltpu.VMEM((TILE_B, LANE), jnp.float32),
                pltpu.SemaphoreType.DMA((TILE_B,)),
            ]),
        compiler_params=pltpu.CompilerParams(
            dimension_semantics=("parallel",),
            vmem_limit_bytes=32 * 1024 * 1024),
    )(cls_ids, img_flat, packed["w_img_enc_p"], packed["emb_proj_p"],
      packed["w_cls_p"], packed["biases_p"])

    return out_padded[:B, :packed["num_classes"]]


# -----------------------------------------------------------------------------
# Main
# -----------------------------------------------------------------------------

if __name__ == "__main__":
    key = jax.random.PRNGKey(0)
    k_param, k_img, k_txt = jax.random.split(key, 3)

    # Small shapes consistent with the module's forward.
    B, C, H, W = 2, 4, 16, 16        # image_input NCHW
    SEQ, VOCAB, EMB = 8, 64, 32      # text_input [B, SEQ]
    TEXT_HIDDEN = 32                 # text_encoder.model.config.hidden_size
    IMAGE_FEATURES = 32              # image_encoder.model.num_features
    NUM_CLASSES = 16

    params = init_params(k_param, vocab=VOCAB, emb_dim=EMB,
                         text_hidden=TEXT_HIDDEN, img_channels=C,
                         image_features=IMAGE_FEATURES, num_classes=NUM_CLASSES)
    packed = pack_params(params, spatial_size=H * W)

    image_input = jax.random.normal(k_img, (B, C, H, W), jnp.float32)
    text_input = jax.random.randint(k_txt, (B, SEQ), 0, VOCAB, jnp.int32)
    attention_mask = jnp.ones((B, SEQ), jnp.int32)

    out = multi_modal_forward(packed, text_input, attention_mask, image_input)
    out = jax.block_until_ready(out)
    assert out.shape == (B, NUM_CLASSES), out.shape

    # Pure-JAX reference of the full forward (unfolded parameters).
    cls_emb_ref = params["emb_table"][text_input[:, 0]]
    txt_feat_ref = jnp.tanh(cls_emb_ref @ params["w_txt_enc"] + params["b_txt_enc"])
    gap_ref = image_input.reshape(B, C, H * W).mean(-1)
    img_feat_ref = jnp.tanh(gap_ref @ params["w_img_enc"] + params["b_img_enc"])
    ref = (params["fusion_weight"][0] * (img_feat_ref @ params["w_img_cls"] + params["b_img_cls"])
           + params["fusion_weight"][1] * (txt_feat_ref @ params["w_txt_cls"] + params["b_txt_cls"]))
    assert jnp.allclose(out, ref, atol=1e-4, rtol=1e-4), float(jnp.max(jnp.abs(out - ref)))

    print("KERNEL_OK")
</pallas_src>

<mosaic_0001>
module attributes {stable_mosaic.version = 11 : i64} {
  func.func @fused_multimodal_kernel(%arg0: i32, %arg1: memref<8xi32, #tpu.memory_space<smem>>, %arg2: memref<8x1024xf32, #tpu.memory_space<vmem>>, %arg3: memref<1024x128xf32, #tpu.memory_space<vmem>>, %arg4: memref<64x128xf32, #tpu.memory_space<any>>, %arg5: memref<256x128xf32, #tpu.memory_space<vmem>>, %arg6: memref<8x128xf32, #tpu.memory_space<vmem>>, %arg7: memref<8x128xf32, #tpu.memory_space<vmem>>, %arg8: memref<8x128xf32, #tpu.memory_space<vmem>>, %arg9: memref<8x!tpu.dma_semaphore, #tpu.memory_space<semaphore_mem>>) attributes {dimension_semantics = [#tpu.dimension_semantics<parallel>], iteration_bounds = array<i64: 1>, scalar_prefetch = 1 : i64, scratch_operands = 2 : i64, tpu.core_type = #tpu.core_type<tc>, window_params = [{transform_indices = @transform_0, window_bounds = array<i64: 8, 1024>}, {pipeline_mode = #tpu.pipeline_mode<synchronous>, transform_indices = @transform_1, window_bounds = array<i64: 1024, 128>}, {}, {pipeline_mode = #tpu.pipeline_mode<synchronous>, transform_indices = @transform_3, window_bounds = array<i64: 256, 128>}, {pipeline_mode = #tpu.pipeline_mode<synchronous>, transform_indices = @transform_4, window_bounds = array<i64: 8, 128>}, {transform_indices = @transform_5, window_bounds = array<i64: 8, 128>}]} {
    %c8_i32 = arith.constant 8 : i32
    %0 = arith.muli %arg0, %c8_i32 : i32
    %c0_i32 = arith.constant 0 : i32
    %1 = arith.addi %0, %c0_i32 : i32
    %2 = arith.index_cast %1 : i32 to index
    %3 = memref.load %arg1[%2] : memref<8xi32, #tpu.memory_space<smem>>
    %c0_i32_0 = arith.constant 0 : i32
    %c0_i32_1 = arith.constant 0 : i32
    %c0_i32_2 = arith.constant 0 : i32
    %4 = tpu.memref_slice %arg4[%3, %c0_i32_2] : memref<64x128xf32, #tpu.memory_space<any>> -> memref<1x128xf32, #tpu.memory_space<any>>
    %5 = tpu.memref_squeeze %4 : memref<1x128xf32, #tpu.memory_space<any>> -> memref<128xf32, #tpu.memory_space<any>>
    %c0_i32_3 = arith.constant 0 : i32
    %6 = tpu.memref_slice %arg8[%c0_i32_0, %c0_i32_3] : memref<8x128xf32, #tpu.memory_space<vmem>> -> memref<1x128xf32, #tpu.memory_space<vmem>>
    %7 = tpu.memref_squeeze %6 : memref<1x128xf32, #tpu.memory_space<vmem>> -> memref<128xf32, #tpu.memory_space<vmem>>
    %8 = tpu.memref_slice %arg9[%c0_i32_1] : memref<8x!tpu.dma_semaphore, #tpu.memory_space<semaphore_mem>> -> memref<1x!tpu.dma_semaphore, #tpu.memory_space<semaphore_mem>>
    %9 = tpu.memref_squeeze %8 : memref<1x!tpu.dma_semaphore, #tpu.memory_space<semaphore_mem>> -> memref<!tpu.dma_semaphore, #tpu.memory_space<semaphore_mem>>
    tpu.enqueue_dma source(%5 : memref<128xf32, #tpu.memory_space<any>>) target(%7 : memref<128xf32, #tpu.memory_space<vmem>>) target_semaphore(%9 : memref<!tpu.dma_semaphore, #tpu.memory_space<semaphore_mem>>)
    %c1_i32 = arith.constant 1 : i32
    %10 = arith.addi %0, %c1_i32 : i32
    %11 = arith.index_cast %10 : i32 to index
    %12 = memref.load %arg1[%11] : memref<8xi32, #tpu.memory_space<smem>>
    %c1_i32_4 = arith.constant 1 : i32
    %c1_i32_5 = arith.constant 1 : i32
    %c0_i32_6 = arith.constant 0 : i32
    %13 = tpu.memref_slice %arg4[%12, %c0_i32_6] : memref<64x128xf32, #tpu.memory_space<any>> -> memref<1x128xf32, #tpu.memory_space<any>>
    %14 = tpu.memref_squeeze %13 : memref<1x128xf32, #tpu.memory_space<any>> -> memref<128xf32, #tpu.memory_space<any>>
    %c0_i32_7 = arith.constant 0 : i32
    %15 = tpu.memref_slice %arg8[%c1_i32_4, %c0_i32_7] : memref<8x128xf32, #tpu.memory_space<vmem>> -> memref<1x128xf32, #tpu.memory_space<vmem>>
    %16 = tpu.memref_squeeze %15 : memref<1x128xf32, #tpu.memory_space<vmem>> -> memref<128xf32, #tpu.memory_space<vmem>>
    %17 = tpu.memref_slice %arg9[%c1_i32_5] : memref<8x!tpu.dma_semaphore, #tpu.memory_space<semaphore_mem>> -> memref<1x!tpu.dma_semaphore, #tpu.memory_space<semaphore_mem>>
    %18 = tpu.memref_squeeze %17 : memref<1x!tpu.dma_semaphore, #tpu.memory_space<semaphore_mem>> -> memref<!tpu.dma_semaphore, #tpu.memory_space<semaphore_mem>>
    tpu.enqueue_dma source(%14 : memref<128xf32, #tpu.memory_space<any>>) target(%16 : memref<128xf32, #tpu.memory_space<vmem>>) target_semaphore(%18 : memref<!tpu.dma_semaphore, #tpu.memory_space<semaphore_mem>>)
    %c2_i32 = arith.constant 2 : i32
    %19 = arith.addi %0, %c2_i32 : i32
    %20 = arith.index_cast %19 : i32 to index
    %21 = memref.load %arg1[%20] : memref<8xi32, #tpu.memory_space<smem>>
    %c2_i32_8 = arith.constant 2 : i32
    %c2_i32_9 = arith.constant 2 : i32
    %c0_i32_10 = arith.constant 0 : i32
    %22 = tpu.memref_slice %arg4[%21, %c0_i32_10] : memref<64x128xf32, #tpu.memory_space<any>> -> memref<1x128xf32, #tpu.memory_space<any>>
    %23 = tpu.memref_squeeze %22 : memref<1x128xf32, #tpu.memory_space<any>> -> memref<128xf32, #tpu.memory_space<any>>
    %c0_i32_11 = arith.constant 0 : i32
    %24 = tpu.memref_slice %arg8[%c2_i32_8, %c0_i32_11] : memref<8x128xf32, #tpu.memory_space<vmem>> -> memref<1x128xf32, #tpu.memory_space<vmem>>
    %25 = tpu.memref_squeeze %24 : memref<1x128xf32, #tpu.memory_space<vmem>> -> memref<128xf32, #tpu.memory_space<vmem>>
    %26 = tpu.memref_slice %arg9[%c2_i32_9] : memref<8x!tpu.dma_semaphore, #tpu.memory_space<semaphore_mem>> -> memref<1x!tpu.dma_semaphore, #tpu.memory_space<semaphore_mem>>
    %27 = tpu.memref_squeeze %26 : memref<1x!tpu.dma_semaphore, #tpu.memory_space<semaphore_mem>> -> memref<!tpu.dma_semaphore, #tpu.memory_space<semaphore_mem>>
    tpu.enqueue_dma source(%23 : memref<128xf32, #tpu.memory_space<any>>) target(%25 : memref<128xf32, #tpu.memory_space<vmem>>) target_semaphore(%27 : memref<!tpu.dma_semaphore, #tpu.memory_space<semaphore_mem>>)
    %c3_i32 = arith.constant 3 : i32
    %28 = arith.addi %0, %c3_i32 : i32
    %29 = arith.index_cast %28 : i32 to index
    %30 = memref.load %arg1[%29] : memref<8xi32, #tpu.memory_space<smem>>
    %c3_i32_12 = arith.constant 3 : i32
    %c3_i32_13 = arith.constant 3 : i32
    %c0_i32_14 = arith.constant 0 : i32
    %31 = tpu.memref_slice %arg4[%30, %c0_i32_14] : memref<64x128xf32, #tpu.memory_space<any>> -> memref<1x128xf32, #tpu.memory_space<any>>
    %32 = tpu.memref_squeeze %31 : memref<1x128xf32, #tpu.memory_space<any>> -> memref<128xf32, #tpu.memory_space<any>>
    %c0_i32_15 = arith.constant 0 : i32
    %33 = tpu.memref_slice %arg8[%c3_i32_12, %c0_i32_15] : memref<8x128xf32, #tpu.memory_space<vmem>> -> memref<1x128xf32, #tpu.memory_space<vmem>>
    %34 = tpu.memref_squeeze %33 : memref<1x128xf32, #tpu.memory_space<vmem>> -> memref<128xf32, #tpu.memory_space<vmem>>
    %35 = tpu.memref_slice %arg9[%c3_i32_13] : memref<8x!tpu.dma_semaphore, #tpu.memory_space<semaphore_mem>> -> memref<1x!tpu.dma_semaphore, #tpu.memory_space<semaphore_mem>>
    %36 = tpu.memref_squeeze %35 : memref<1x!tpu.dma_semaphore, #tpu.memory_space<semaphore_mem>> -> memref<!tpu.dma_semaphore, #tpu.memory_space<semaphore_mem>>
    tpu.enqueue_dma source(%32 : memref<128xf32, #tpu.memory_space<any>>) target(%34 : memref<128xf32, #tpu.memory_space<vmem>>) target_semaphore(%36 : memref<!tpu.dma_semaphore, #tpu.memory_space<semaphore_mem>>)
    %c4_i32 = arith.constant 4 : i32
    %37 = arith.addi %0, %c4_i32 : i32
    %38 = arith.index_cast %37 : i32 to index
    %39 = memref.load %arg1[%38] : memref<8xi32, #tpu.memory_space<smem>>
    %c4_i32_16 = arith.constant 4 : i32
    %c4_i32_17 = arith.constant 4 : i32
    %c0_i32_18 = arith.constant 0 : i32
    %40 = tpu.memref_slice %arg4[%39, %c0_i32_18] : memref<64x128xf32, #tpu.memory_space<any>> -> memref<1x128xf32, #tpu.memory_space<any>>
    %41 = tpu.memref_squeeze %40 : memref<1x128xf32, #tpu.memory_space<any>> -> memref<128xf32, #tpu.memory_space<any>>
    %c0_i32_19 = arith.constant 0 : i32
    %42 = tpu.memref_slice %arg8[%c4_i32_16, %c0_i32_19] : memref<8x128xf32, #tpu.memory_space<vmem>> -> memref<1x128xf32, #tpu.memory_space<vmem>>
    %43 = tpu.memref_squeeze %42 : memref<1x128xf32, #tpu.memory_space<vmem>> -> memref<128xf32, #tpu.memory_space<vmem>>
    %44 = tpu.memref_slice %arg9[%c4_i32_17] : memref<8x!tpu.dma_semaphore, #tpu.memory_space<semaphore_mem>> -> memref<1x!tpu.dma_semaphore, #tpu.memory_space<semaphore_mem>>
    %45 = tpu.memref_squeeze %44 : memref<1x!tpu.dma_semaphore, #tpu.memory_space<semaphore_mem>> -> memref<!tpu.dma_semaphore, #tpu.memory_space<semaphore_mem>>
    tpu.enqueue_dma source(%41 : memref<128xf32, #tpu.memory_space<any>>) target(%43 : memref<128xf32, #tpu.memory_space<vmem>>) target_semaphore(%45 : memref<!tpu.dma_semaphore, #tpu.memory_space<semaphore_mem>>)
    %c5_i32 = arith.constant 5 : i32
    %46 = arith.addi %0, %c5_i32 : i32
    %47 = arith.index_cast %46 : i32 to index
    %48 = memref.load %arg1[%47] : memref<8xi32, #tpu.memory_space<smem>>
    %c5_i32_20 = arith.constant 5 : i32
    %c5_i32_21 = arith.constant 5 : i32
    %c0_i32_22 = arith.constant 0 : i32
    %49 = tpu.memref_slice %arg4[%48, %c0_i32_22] : memref<64x128xf32, #tpu.memory_space<any>> -> memref<1x128xf32, #tpu.memory_space<any>>
    %50 = tpu.memref_squeeze %49 : memref<1x128xf32, #tpu.memory_space<any>> -> memref<128xf32, #tpu.memory_space<any>>
    %c0_i32_23 = arith.constant 0 : i32
    %51 = tpu.memref_slice %arg8[%c5_i32_20, %c0_i32_23] : memref<8x128xf32, #tpu.memory_space<vmem>> -> memref<1x128xf32, #tpu.memory_space<vmem>>
    %52 = tpu.memref_squeeze %51 : memref<1x128xf32, #tpu.memory_space<vmem>> -> memref<128xf32, #tpu.memory_space<vmem>>
    %53 = tpu.memref_slice %arg9[%c5_i32_21] : memref<8x!tpu.dma_semaphore, #tpu.memory_space<semaphore_mem>> -> memref<1x!tpu.dma_semaphore, #tpu.memory_space<semaphore_mem>>
    %54 = tpu.memref_squeeze %53 : memref<1x!tpu.dma_semaphore, #tpu.memory_space<semaphore_mem>> -> memref<!tpu.dma_semaphore, #tpu.memory_space<semaphore_mem>>
    tpu.enqueue_dma source(%50 : memref<128xf32, #tpu.memory_space<any>>) target(%52 : memref<128xf32, #tpu.memory_space<vmem>>) target_semaphore(%54 : memref<!tpu.dma_semaphore, #tpu.memory_space<semaphore_mem>>)
    %c6_i32 = arith.constant 6 : i32
    %55 = arith.addi %0, %c6_i32 : i32
    %56 = arith.index_cast %55 : i32 to index
    %57 = memref.load %arg1[%56] : memref<8xi32, #tpu.memory_space<smem>>
    %c6_i32_24 = arith.constant 6 : i32
    %c6_i32_25 = arith.constant 6 : i32
    %c0_i32_26 = arith.constant 0 : i32
    %58 = tpu.memref_slice %arg4[%57, %c0_i32_26] : memref<64x128xf32, #tpu.memory_space<any>> -> memref<1x128xf32, #tpu.memory_space<any>>
    %59 = tpu.memref_squeeze %58 : memref<1x128xf32, #tpu.memory_space<any>> -> memref<128xf32, #tpu.memory_space<any>>
    %c0_i32_27 = arith.constant 0 : i32
    %60 = tpu.memref_slice %arg8[%c6_i32_24, %c0_i32_27] : memref<8x128xf32, #tpu.memory_space<vmem>> -> memref<1x128xf32, #tpu.memory_space<vmem>>
    %61 = tpu.memref_squeeze %60 : memref<1x128xf32, #tpu.memory_space<vmem>> -> memref<128xf32, #tpu.memory_space<vmem>>
    %62 = tpu.memref_slice %arg9[%c6_i32_25] : memref<8x!tpu.dma_semaphore, #tpu.memory_space<semaphore_mem>> -> memref<1x!tpu.dma_semaphore, #tpu.memory_space<semaphore_mem>>
    %63 = tpu.memref_squeeze %62 : memref<1x!tpu.dma_semaphore, #tpu.memory_space<semaphore_mem>> -> memref<!tpu.dma_semaphore, #tpu.memory_space<semaphore_mem>>
    tpu.enqueue_dma source(%59 : memref<128xf32, #tpu.memory_space<any>>) target(%61 : memref<128xf32, #tpu.memory_space<vmem>>) target_semaphore(%63 : memref<!tpu.dma_semaphore, #tpu.memory_space<semaphore_mem>>)
    %c7_i32 = arith.constant 7 : i32
    %64 = arith.addi %0, %c7_i32 : i32
    %65 = arith.index_cast %64 : i32 to index
    %66 = memref.load %arg1[%65] : memref<8xi32, #tpu.memory_space<smem>>
    %c7_i32_28 = arith.constant 7 : i32
    %c7_i32_29 = arith.constant 7 : i32
    %c0_i32_30 = arith.constant 0 : i32
    %67 = tpu.memref_slice %arg4[%66, %c0_i32_30] : memref<64x128xf32, #tpu.memory_space<any>> -> memref<1x128xf32, #tpu.memory_space<any>>
    %68 = tpu.memref_squeeze %67 : memref<1x128xf32, #tpu.memory_space<any>> -> memref<128xf32, #tpu.memory_space<any>>
    %c0_i32_31 = arith.constant 0 : i32
    %69 = tpu.memref_slice %arg8[%c7_i32_28, %c0_i32_31] : memref<8x128xf32, #tpu.memory_space<vmem>> -> memref<1x128xf32, #tpu.memory_space<vmem>>
    %70 = tpu.memref_squeeze %69 : memref<1x128xf32, #tpu.memory_space<vmem>> -> memref<128xf32, #tpu.memory_space<vmem>>
    %71 = tpu.memref_slice %arg9[%c7_i32_29] : memref<8x!tpu.dma_semaphore, #tpu.memory_space<semaphore_mem>> -> memref<1x!tpu.dma_semaphore, #tpu.memory_space<semaphore_mem>>
    %72 = tpu.memref_squeeze %71 : memref<1x!tpu.dma_semaphore, #tpu.memory_space<semaphore_mem>> -> memref<!tpu.dma_semaphore, #tpu.memory_space<semaphore_mem>>
    tpu.enqueue_dma source(%68 : memref<128xf32, #tpu.memory_space<any>>) target(%70 : memref<128xf32, #tpu.memory_space<vmem>>) target_semaphore(%72 : memref<!tpu.dma_semaphore, #tpu.memory_space<semaphore_mem>>)
    %c0 = arith.constant 0 : index
    %c0_32 = arith.constant 0 : index
    %73 = vector.load %arg2[%c0, %c0_32] : memref<8x1024xf32, #tpu.memory_space<vmem>>, vector<8x1024xf32>
    %c0_33 = arith.constant 0 : index
    %c0_34 = arith.constant 0 : index
    %74 = vector.load %arg3[%c0_33, %c0_34] : memref<1024x128xf32, #tpu.memory_space<vmem>>, vector<1024x128xf32>
    %cst = arith.constant dense<0.000000e+00> : vector<8x128xf32>
    %75 = tpu.matmul %73, %74, %cst {dimension_numbers = #tpu.dot_dimension_numbers<[1], [0], [0], [1], [0, 0, 1, 1], [], []>} : vector<8x1024xf32>, vector<1024x128xf32>, vector<8x128xf32> -> vector<8x128xf32>
    %c0_35 = arith.constant 0 : index
    %c0_36 = arith.constant 0 : index
    %76 = vector.load %arg6[%c0_35, %c0_36] : memref<8x128xf32, #tpu.memory_space<vmem>>, vector<1x128xf32>
    %77 = vector.broadcast %76 : vector<1x128xf32> to vector<8x128xf32>
    %78 = arith.addf %75, %77 : vector<8x128xf32>
    %79 = math.tanh %78 : vector<8x128xf32>
    %c0_i32_37 = arith.constant 0 : i32
    %c0_i32_38 = arith.constant 0 : i32
    %c0_i32_39 = arith.constant 0 : i32
    %80 = tpu.memref_slice %arg4[%3, %c0_i32_39] : memref<64x128xf32, #tpu.memory_space<any>> -> memref<1x128xf32, #tpu.memory_space<any>>
    %81 = tpu.memref_squeeze %80 : memref<1x128xf32, #tpu.memory_space<any>> -> memref<128xf32, #tpu.memory_space<any>>
    %c0_i32_40 = arith.constant 0 : i32
    %82 = tpu.memref_slice %arg8[%c0_i32_37, %c0_i32_40] : memref<8x128xf32, #tpu.memory_space<vmem>> -> memref<1x128xf32, #tpu.memory_space<vmem>>
    %83 = tpu.memref_squeeze %82 : memref<1x128xf32, #tpu.memory_space<vmem>> -> memref<128xf32, #tpu.memory_space<vmem>>
    %84 = tpu.memref_slice %arg9[%c0_i32_38] : memref<8x!tpu.dma_semaphore, #tpu.memory_space<semaphore_mem>> -> memref<1x!tpu.dma_semaphore, #tpu.memory_space<semaphore_mem>>
    %85 = tpu.memref_squeeze %84 : memref<1x!tpu.dma_semaphore, #tpu.memory_space<semaphore_mem>> -> memref<!tpu.dma_semaphore, #tpu.memory_space<semaphore_mem>>
    tpu.wait_dma2 semaphore(%85 : memref<!tpu.dma_semaphore, #tpu.memory_space<semaphore_mem>>) src(%81 : memref<128xf32, #tpu.memory_space<any>>) dst(%83 : memref<128xf32, #tpu.memory_space<vmem>>)
    %c1_i32_41 = arith.constant 1 : i32
    %c1_i32_42 = arith.constant 1 : i32
    %c0_i32_43 = arith.constant 0 : i32
    %86 = tpu.memref_slice %arg4[%12, %c0_i32_43] : memref<64x128xf32, #tpu.memory_space<any>> -> memref<1x128xf32, #tpu.memory_space<any>>
    %87 = tpu.memref_squeeze %86 : memref<1x128xf32, #tpu.memory_space<any>> -> memref<128xf32, #tpu.memory_space<any>>
    %c0_i32_44 = arith.constant 0 : i32
    %88 = tpu.memref_slice %arg8[%c1_i32_41, %c0_i32_44] : memref<8x128xf32, #tpu.memory_space<vmem>> -> memref<1x128xf32, #tpu.memory_space<vmem>>
    %89 = tpu.memref_squeeze %88 : memref<1x128xf32, #tpu.memory_space<vmem>> -> memref<128xf32, #tpu.memory_space<vmem>>
    %90 = tpu.memref_slice %arg9[%c1_i32_42] : memref<8x!tpu.dma_semaphore, #tpu.memory_space<semaphore_mem>> -> memref<1x!tpu.dma_semaphore, #tpu.memory_space<semaphore_mem>>
    %91 = tpu.memref_squeeze %90 : memref<1x!tpu.dma_semaphore, #tpu.memory_space<semaphore_mem>> -> memref<!tpu.dma_semaphore, #tpu.memory_space<semaphore_mem>>
    tpu.wait_dma2 semaphore(%91 : memref<!tpu.dma_semaphore, #tpu.memory_space<semaphore_mem>>) src(%87 : memref<128xf32, #tpu.memory_space<any>>) dst(%89 : memref<128xf32, #tpu.memory_space<vmem>>)
    %c2_i32_45 = arith.constant 2 : i32
    %c2_i32_46 = arith.constant 2 : i32
    %c0_i32_47 = arith.constant 0 : i32
    %92 = tpu.memref_slice %arg4[%21, %c0_i32_47] : memref<64x128xf32, #tpu.memory_space<any>> -> memref<1x128xf32, #tpu.memory_space<any>>
    %93 = tpu.memref_squeeze %92 : memref<1x128xf32, #tpu.memory_space<any>> -> memref<128xf32, #tpu.memory_space<any>>
    %c0_i32_48 = arith.constant 0 : i32
    %94 = tpu.memref_slice %arg8[%c2_i32_45, %c0_i32_48] : memref<8x128xf32, #tpu.memory_space<vmem>> -> memref<1x128xf32, #tpu.memory_space<vmem>>
    %95 = tpu.memref_squeeze %94 : memref<1x128xf32, #tpu.memory_space<vmem>> -> memref<128xf32, #tpu.memory_space<vmem>>
    %96 = tpu.memref_slice %arg9[%c2_i32_46] : memref<8x!tpu.dma_semaphore, #tpu.memory_space<semaphore_mem>> -> memref<1x!tpu.dma_semaphore, #tpu.memory_space<semaphore_mem>>
    %97 = tpu.memref_squeeze %96 : memref<1x!tpu.dma_semaphore, #tpu.memory_space<semaphore_mem>> -> memref<!tpu.dma_semaphore, #tpu.memory_space<semaphore_mem>>
    tpu.wait_dma2 semaphore(%97 : memref<!tpu.dma_semaphore, #tpu.memory_space<semaphore_mem>>) src(%93 : memref<128xf32, #tpu.memory_space<any>>) dst(%95 : memref<128xf32, #tpu.memory_space<vmem>>)
    %c3_i32_49 = arith.constant 3 : i32
    %c3_i32_50 = arith.constant 3 : i32
    %c0_i32_51 = arith.constant 0 : i32
    %98 = tpu.memref_slice %arg4[%30, %c0_i32_51] : memref<64x128xf32, #tpu.memory_space<any>> -> memref<1x128xf32, #tpu.memory_space<any>>
    %99 = tpu.memref_squeeze %98 : memref<1x128xf32, #tpu.memory_space<any>> -> memref<128xf32, #tpu.memory_space<any>>
    %c0_i32_52 = arith.constant 0 : i32
    %100 = tpu.memref_slice %arg8[%c3_i32_49, %c0_i32_52] : memref<8x128xf32, #tpu.memory_space<vmem>> -> memref<1x128xf32, #tpu.memory_space<vmem>>
    %101 = tpu.memref_squeeze %100 : memref<1x128xf32, #tpu.memory_space<vmem>> -> memref<128xf32, #tpu.memory_space<vmem>>
    %102 = tpu.memref_slice %arg9[%c3_i32_50] : memref<8x!tpu.dma_semaphore, #tpu.memory_space<semaphore_mem>> -> memref<1x!tpu.dma_semaphore, #tpu.memory_space<semaphore_mem>>
    %103 = tpu.memref_squeeze %102 : memref<1x!tpu.dma_semaphore, #tpu.memory_space<semaphore_mem>> -> memref<!tpu.dma_semaphore, #tpu.memory_space<semaphore_mem>>
    tpu.wait_dma2 semaphore(%103 : memref<!tpu.dma_semaphore, #tpu.memory_space<semaphore_mem>>) src(%99 : memref<128xf32, #tpu.memory_space<any>>) dst(%101 : memref<128xf32, #tpu.memory_space<vmem>>)
    %c4_i32_53 = arith.constant 4 : i32
    %c4_i32_54 = arith.constant 4 : i32
    %c0_i32_55 = arith.constant 0 : i32
    %104 = tpu.memref_slice %arg4[%39, %c0_i32_55] : memref<64x128xf32, #tpu.memory_space<any>> -> memref<1x128xf32, #tpu.memory_space<any>>
    %105 = tpu.memref_squeeze %104 : memref<1x128xf32, #tpu.memory_space<any>> -> memref<128xf32, #tpu.memory_space<any>>
    %c0_i32_56 = arith.constant 0 : i32
    %106 = tpu.memref_slice %arg8[%c4_i32_53, %c0_i32_56] : memref<8x128xf32, #tpu.memory_space<vmem>> -> memref<1x128xf32, #tpu.memory_space<vmem>>
    %107 = tpu.memref_squeeze %106 : memref<1x128xf32, #tpu.memory_space<vmem>> -> memref<128xf32, #tpu.memory_space<vmem>>
    %108 = tpu.memref_slice %arg9[%c4_i32_54] : memref<8x!tpu.dma_semaphore, #tpu.memory_space<semaphore_mem>> -> memref<1x!tpu.dma_semaphore, #tpu.memory_space<semaphore_mem>>
    %109 = tpu.memref_squeeze %108 : memref<1x!tpu.dma_semaphore, #tpu.memory_space<semaphore_mem>> -> memref<!tpu.dma_semaphore, #tpu.memory_space<semaphore_mem>>
    tpu.wait_dma2 semaphore(%109 : memref<!tpu.dma_semaphore, #tpu.memory_space<semaphore_mem>>) src(%105 : memref<128xf32, #tpu.memory_space<any>>) dst(%107 : memref<128xf32, #tpu.memory_space<vmem>>)
    %c5_i32_57 = arith.constant 5 : i32
    %c5_i32_58 = arith.constant 5 : i32
    %c0_i32_59 = arith.constant 0 : i32
    %110 = tpu.memref_slice %arg4[%48, %c0_i32_59] : memref<64x128xf32, #tpu.memory_space<any>> -> memref<1x128xf32, #tpu.memory_space<any>>
    %111 = tpu.memref_squeeze %110 : memref<1x128xf32, #tpu.memory_space<any>> -> memref<128xf32, #tpu.memory_space<any>>
    %c0_i32_60 = arith.constant 0 : i32
    %112 = tpu.memref_slice %arg8[%c5_i32_57, %c0_i32_60] : memref<8x128xf32, #tpu.memory_space<vmem>> -> memref<1x128xf32, #tpu.memory_space<vmem>>
    %113 = tpu.memref_squeeze %112 : memref<1x128xf32, #tpu.memory_space<vmem>> -> memref<128xf32, #tpu.memory_space<vmem>>
    %114 = tpu.memref_slice %arg9[%c5_i32_58] : memref<8x!tpu.dma_semaphore, #tpu.memory_space<semaphore_mem>> -> memref<1x!tpu.dma_semaphore, #tpu.memory_space<semaphore_mem>>
    %115 = tpu.memref_squeeze %114 : memref<1x!tpu.dma_semaphore, #tpu.memory_space<semaphore_mem>> -> memref<!tpu.dma_semaphore, #tpu.memory_space<semaphore_mem>>
    tpu.wait_dma2 semaphore(%115 : memref<!tpu.dma_semaphore, #tpu.memory_space<semaphore_mem>>) src(%111 : memref<128xf32, #tpu.memory_space<any>>) dst(%113 : memref<128xf32, #tpu.memory_space<vmem>>)
    %c6_i32_61 = arith.constant 6 : i32
    %c6_i32_62 = arith.constant 6 : i32
    %c0_i32_63 = arith.constant 0 : i32
    %116 = tpu.memref_slice %arg4[%57, %c0_i32_63] : memref<64x128xf32, #tpu.memory_space<any>> -> memref<1x128xf32, #tpu.memory_space<any>>
    %117 = tpu.memref_squeeze %116 : memref<1x128xf32, #tpu.memory_space<any>> -> memref<128xf32, #tpu.memory_space<any>>
    %c0_i32_64 = arith.constant 0 : i32
    %118 = tpu.memref_slice %arg8[%c6_i32_61, %c0_i32_64] : memref<8x128xf32, #tpu.memory_space<vmem>> -> memref<1x128xf32, #tpu.memory_space<vmem>>
    %119 = tpu.memref_squeeze %118 : memref<1x128xf32, #tpu.memory_space<vmem>> -> memref<128xf32, #tpu.memory_space<vmem>>
    %120 = tpu.memref_slice %arg9[%c6_i32_62] : memref<8x!tpu.dma_semaphore, #tpu.memory_space<semaphore_mem>> -> memref<1x!tpu.dma_semaphore, #tpu.memory_space<semaphore_mem>>
    %121 = tpu.memref_squeeze %120 : memref<1x!tpu.dma_semaphore, #tpu.memory_space<semaphore_mem>> -> memref<!tpu.dma_semaphore, #tpu.memory_space<semaphore_mem>>
    tpu.wait_dma2 semaphore(%121 : memref<!tpu.dma_semaphore, #tpu.memory_space<semaphore_mem>>) src(%117 : memref<128xf32, #tpu.memory_space<any>>) dst(%119 : memref<128xf32, #tpu.memory_space<vmem>>)
    %c7_i32_65 = arith.constant 7 : i32
    %c7_i32_66 = arith.constant 7 : i32
    %c0_i32_67 = arith.constant 0 : i32
    %122 = tpu.memref_slice %arg4[%66, %c0_i32_67] : memref<64x128xf32, #tpu.memory_space<any>> -> memref<1x128xf32, #tpu.memory_space<any>>
    %123 = tpu.memref_squeeze %122 : memref<1x128xf32, #tpu.memory_space<any>> -> memref<128xf32, #tpu.memory_space<any>>
    %c0_i32_68 = arith.constant 0 : i32
    %124 = tpu.memref_slice %arg8[%c7_i32_65, %c0_i32_68] : memref<8x128xf32, #tpu.memory_space<vmem>> -> memref<1x128xf32, #tpu.memory_space<vmem>>
    %125 = tpu.memref_squeeze %124 : memref<1x128xf32, #tpu.memory_space<vmem>> -> memref<128xf32, #tpu.memory_space<vmem>>
    %126 = tpu.memref_slice %arg9[%c7_i32_66] : memref<8x!tpu.dma_semaphore, #tpu.memory_space<semaphore_mem>> -> memref<1x!tpu.dma_semaphore, #tpu.memory_space<semaphore_mem>>
    %127 = tpu.memref_squeeze %126 : memref<1x!tpu.dma_semaphore, #tpu.memory_space<semaphore_mem>> -> memref<!tpu.dma_semaphore, #tpu.memory_space<semaphore_mem>>
    tpu.wait_dma2 semaphore(%127 : memref<!tpu.dma_semaphore, #tpu.memory_space<semaphore_mem>>) src(%123 : memref<128xf32, #tpu.memory_space<any>>) dst(%125 : memref<128xf32, #tpu.memory_space<vmem>>)
    %c0_69 = arith.constant 0 : index
    %c0_70 = arith.constant 0 : index
    %128 = vector.load %arg8[%c0_69, %c0_70] : memref<8x128xf32, #tpu.memory_space<vmem>>, vector<8x128xf32>
    %c1 = arith.constant 1 : index
    %c0_71 = arith.constant 0 : index
    %129 = vector.load %arg6[%c1, %c0_71] : memref<8x128xf32, #tpu.memory_space<vmem>>, vector<1x128xf32>
    %130 = vector.broadcast %129 : vector<1x128xf32> to vector<8x128xf32>
    %131 = arith.addf %128, %130 : vector<8x128xf32>
    %132 = math.tanh %131 : vector<8x128xf32>
    %133 = tpu.concatenate %79, %132 in 1 : vector<8x128xf32>, vector<8x128xf32> -> vector<8x256xf32>
    %c0_72 = arith.constant 0 : index
    %c0_73 = arith.constant 0 : index
    %134 = vector.load %arg5[%c0_72, %c0_73] : memref<256x128xf32, #tpu.memory_space<vmem>>, vector<256x128xf32>
    %cst_74 = arith.constant dense<0.000000e+00> : vector<8x128xf32>
    %135 = tpu.matmul %133, %134, %cst_74 {dimension_numbers = #tpu.dot_dimension_numbers<[1], [0], [0], [1], [0, 0, 1, 1], [], []>} : vector<8x256xf32>, vector<256x128xf32>, vector<8x128xf32> -> vector<8x128xf32>
    %c2 = arith.constant 2 : index
    %c0_75 = arith.constant 0 : index
    %136 = vector.load %arg6[%c2, %c0_75] : memref<8x128xf32, #tpu.memory_space<vmem>>, vector<1x128xf32>
    %137 = vector.broadcast %136 : vector<1x128xf32> to vector<8x128xf32>
    %138 = arith.addf %135, %137 : vector<8x128xf32>
    %c0_76 = arith.constant 0 : index
    %c0_77 = arith.constant 0 : index
    %139 = vector.load %arg7[%c0_76, %c0_77] : memref<8x128xf32, #tpu.memory_space<vmem>>, vector<8x128xf32>
    tpu.vector_store %arg7[%c0_76, %c0_77], %138 {strides = array<i32>} : memref<8x128xf32, #tpu.memory_space<vmem>>, vector<8x128xf32>,
    return
  }
  func.func @transform_0(%arg0: i32, %arg1: memref<8xi32, #tpu.memory_space<smem>>) -> (i32, i32) {
    %c0_i32 = arith.constant 0 : i32
    %c0_i32_0 = arith.constant 0 : i32
    return %arg0, %c0_i32 : i32, i32
  }
  func.func @transform_1(%arg0: i32, %arg1: memref<8xi32, #tpu.memory_space<smem>>) -> (i32, i32) {
    %c0_i32 = arith.constant 0 : i32
    %c0_i32_0 = arith.constant 0 : i32
    %c0_i32_1 = arith.constant 0 : i32
    return %c0_i32, %c0_i32_0 : i32, i32
  }
  func.func @transform_3(%arg0: i32, %arg1: memref<8xi32, #tpu.memory_space<smem>>) -> (i32, i32) {
    %c0_i32 = arith.constant 0 : i32
    %c0_i32_0 = arith.constant 0 : i32
    %c0_i32_1 = arith.constant 0 : i32
    return %c0_i32, %c0_i32_0 : i32, i32
  }
  func.func @transform_4(%arg0: i32, %arg1: memref<8xi32, #tpu.memory_space<smem>>) -> (i32, i32) {
    %c0_i32 = arith.constant 0 : i32
    %c0_i32_0 = arith.constant 0 : i32
    %c0_i32_1 = arith.constant 0 : i32
    return %c0_i32, %c0_i32_0 : i32, i32
  }
  func.func @transform_5(%arg0: i32, %arg1: memref<8xi32, #tpu.memory_space<smem>>) -> (i32, i32) {
    %c0_i32 = arith.constant 0 : i32
    %c0_i32_0 = arith.constant 0 : i32
    return %arg0, %c0_i32 : i32, i32
  }
}

</mosaic_0001>

<llo_original>
// kernel: tpu_custom_call.1
$region0: #{tpu_custom_call.1}
  #allocation0 [shape = 'u32[]', space=smem, size = 0x4, offset = 0x4, fixed_abs, tag = 'smem constant byte address 0x4 - core index']
  #allocation1 [shape = 'u32[144,128]{1,0:T(1,128)}', space=vmem, size = 0x12000, scoped, tag = 'internal scratch']
  #allocation2 [shape = 'f32[8,128]{1,0:T(8,128)}', space=vmem, size = 0x1000, scoped, tag = 'scratch operand']
  #allocation3 [shape = 's32[8]{0}', space=sflag, size = 0x20, scoped, tag = 'scratch operand']
  #allocation4 [shape = 's32[1]{0}', space=sflag, size = 0x4, scoped, tag = 'scoped memory for tpu_custom_call.1']
  #allocation5 [shape = 'u8[512]{0}', space=smem, size = 0x200, scoped, tag = 'prefetched SMEM operand 0']
  #allocation13 [shape = 's32[]', space=sflag, size = 0x4, offset = 0, fixed_abs, tag = 'sflag constant byte address 0x0 - dummy sync flag']
  #allocation14 [shape = 's32[]', space=sflag, size = 0x4, offset = 0, fixed_abs, tag = 'sflag constant byte address 0x0 - dummy sync flag']
  #allocation15 [shape = 'u32[]', space=smem, size = 0x4, offset = 0x44, fixed_abs, tag = 'smem constant byte address 0x44 - assertion arg 0']
  #allocation16 [shape = 'u32[]', space=smem, size = 0x4, offset = 0x48, fixed_abs, tag = 'smem constant byte address 0x48 - assertion arg 1']
  #allocation17 [shape = 's32[]', space=sflag, size = 0x4, offset = 0, fixed_abs, tag = 'sflag constant byte address 0x0 - dummy sync flag']
  #allocation18 [shape = 's32[]', space=sflag, size = 0x4, offset = 0, fixed_abs, tag = 'sflag constant byte address 0x0 - dummy sync flag']
  #allocation19 [shape = 's32[]', space=sflag, size = 0x4, offset = 0, fixed_abs, tag = 'sflag constant byte address 0x0 - dummy sync flag']
  #allocation20 [shape = 's32[]', space=sflag, size = 0x4, offset = 0, fixed_abs, tag = 'sflag constant byte address 0x0 - dummy sync flag']
  #allocation21 [shape = 's32[]', space=sflag, size = 0x4, offset = 0, fixed_abs, tag = 'sflag constant byte address 0x0 - dummy sync flag']
  #allocation22 [shape = 's32[]', space=sflag, size = 0x4, offset = 0, fixed_abs, tag = 'sflag constant byte address 0x0 - dummy sync flag']
  #allocation23 [shape = 's32[]', space=sflag, size = 0x4, offset = 0, fixed_abs, tag = 'sflag constant byte address 0x0 - dummy sync flag']
  #allocation24 [shape = 's32[]', space=sflag, size = 0x4, offset = 0, fixed_abs, tag = 'sflag constant byte address 0x0 - dummy sync flag']
  #allocation25 [shape = 's32[]', space=sflag, size = 0x4, offset = 0, fixed_abs, tag = 'sflag constant byte address 0x0 - dummy sync flag']
  #allocation26 [shape = 's32[]', space=sflag, size = 0x4, offset = 0, fixed_abs, tag = 'sflag constant byte address 0x0 - dummy sync flag']
  #allocation27 [shape = 's32[]', space=sflag, size = 0x4, offset = 0, fixed_abs, tag = 'sflag constant byte address 0x0 - dummy sync flag']
  #allocation28 [shape = 's32[]', space=sflag, size = 0x4, offset = 0, fixed_abs, tag = 'sflag constant byte address 0x0 - dummy sync flag']
  #allocation29 [shape = 's32[]', space=sflag, size = 0x4, offset = 0, fixed_abs, tag = 'sflag constant byte address 0x0 - dummy sync flag']
  #allocation30 [shape = 's32[]', space=sflag, size = 0x4, offset = 0, fixed_abs, tag = 'sflag constant byte address 0x0 - dummy sync flag']
  %s0 = inlined_call_operand.hbm [shape: s32[8], index: 0, kind: input, shape index: {}]
  %s1 = inlined_call_operand.hbm [shape: f32[8,1024], index: 1, kind: input, shape index: {}]
  %s2 = inlined_call_operand.hbm [shape: f32[1024,128], index: 2, kind: input, shape index: {}]
  %s3 = inlined_call_operand.hbm [shape: f32[64,128], index: 3, kind: input, shape index: {}]
  %s4 = inlined_call_operand.hbm [shape: f32[256,128], index: 4, kind: input, shape index: {}]
  %s5 = inlined_call_operand.vmem [shape: f32[8,128], index: 5, kind: input, shape index: {}]
  %s6 = inlined_call_operand.hbm [shape: f32[8,128], index: 6, kind: output, shape index: {}]
  %s7 = sld [smem:[#allocation0]]
  $region70: #{tpu_custom_call.1} parent=0
    _
  %s9 = ssub.s32 1, %s7
  %s10 = scalar_select 0, %s9, %s7
  %12 = dma.hbm_to_smem %s0, 16, [#allocation5], [#allocation4]
  %13 = dma.done [#allocation4], 16
  %14 = sfence
  $region1: #{tpu_custom_call.1} parent=0
    #allocation6 [shape = 'u8[32768]{0}', space=vmem, size = 0x8000, scoped, tag = 'input window, operand 1, single buffered']
    #allocation7 [shape = 's32[1]{0}', space=sflag, size = 0x4, scoped, tag = 'scoped memory for tpu_custom_call.1']
    #allocation8 [shape = 's32[1]{0}', space=sflag, size = 0x4, scoped, tag = 'scoped memory for tpu_custom_call.1']
    #allocation9 [shape = 'u8[524288]{0}', space=vmem, size = 0x80000, scoped, tag = 'input window, operand 2, single buffered']
    #allocation10 [shape = 's32[1]{0}', space=sflag, size = 0x4, scoped, tag = 'scoped memory for tpu_custom_call.1']
    #allocation11 [shape = 'u8[131072]{0}', space=vmem, size = 0x20000, scoped, tag = 'input window, operand 4, single buffered']
    #allocation12 [shape = 'u8[4096]{0}', space=vmem, size = 0x1000, scoped, tag = 'output window, operand 0, single buffered']
    %15 = vsyncpa [#allocation7], 0
    %16 = vsyncpa [#allocation10], 0
    %17 = vsyncpa [#allocation8], 0
    // Predicated region
    $region2: #{tpu_custom_call.1} parent=1 // pred_check
      _
    $region3: #{tpu_custom_call.1} parent=1 // pred_check_branch
      %19 = sbr.rel (0) target = $region5
    $region4: #{tpu_custom_call.1} parent=1 // pred_region
      %s21 = ssub.s32 1024, 1024
      %22 = vsyncadd [#allocation7], %s21
      %s24 = sshll.u32 [#allocation6], 4
      %s25 = int_to_ptr.vmem [resolvable:$true] %s24
      %27 = dma.hbm_to_vmem [thread:$0]  %s1, 1024, %s25, [#allocation7]
    $region5: #{tpu_custom_call.1} parent=1 // pred_fallthru
      _
    // Predicated region
    $region6: #{tpu_custom_call.1} parent=1 // pred_check
      _
    $region7: #{tpu_custom_call.1} parent=1 // pred_check_branch
      %29 = sbr.rel (0) target = $region9
    $region8: #{tpu_custom_call.1} parent=1 // pred_region
      %s31 = ssub.s32 16384, 16384
      %32 = vsyncadd [#allocation10], %s31
      %s33 = sshll.u32 [#allocation9], 4
      %s34 = int_to_ptr.vmem [resolvable:$true] %s33
      %39 = dma.hbm_to_vmem [thread:$0]  %s2, 16384, %s34, [#allocation10], 128, 128, 8
    $region9: #{tpu_custom_call.1} parent=1 // pred_fallthru
      _
    // Predicated region
    $region10: #{tpu_custom_call.1} parent=1 // pred_check
      _
    $region11: #{tpu_custom_call.1} parent=1 // pred_check_branch
      %41 = sbr.rel (0) target = $region13
    $region12: #{tpu_custom_call.1} parent=1 // pred_region
      %s43 = ssub.s32 4096, 4096
      %44 = vsyncadd [#allocation10], %s43
      %s45 = sshll.u32 [#allocation11], 4
      %s46 = int_to_ptr.vmem [resolvable:$true] %s45
      %51 = dma.hbm_to_vmem [thread:$0]  %s4, 4096, %s46, [#allocation10], 128, 128, 8
    $region13: #{tpu_custom_call.1} parent=1 // pred_fallthru
      _
    // Predicated region
    $region14: #{tpu_custom_call.1} parent=1 // pred_check
      _
    $region15: #{tpu_custom_call.1} parent=1 // pred_check_branch
      %53 = sbr.rel (0) target = $region17
    $region16: #{tpu_custom_call.1} parent=1 // pred_region
      _
    $region17: #{tpu_custom_call.1} parent=1 // pred_fallthru
      _
    // Predicated region
    $region18: #{tpu_custom_call.1} parent=1 // pred_check
      _
    $region19: #{tpu_custom_call.1} parent=1 // pred_check_branch
      %55 = sbr.rel (0) target = $region21
    $region20: #{tpu_custom_call.1} parent=1 // pred_region
      %56 = dma.done [#allocation7], 1024
    $region21: #{tpu_custom_call.1} parent=1 // pred_fallthru
      _
    // Predicated region
    $region22: #{tpu_custom_call.1} parent=1 // pred_check
      _
    $region23: #{tpu_custom_call.1} parent=1 // pred_check_branch
      %58 = sbr.rel (0) target = $region25
    $region24: #{tpu_custom_call.1} parent=1 // pred_region
      %59 = dma.done [#allocation10], 16384
    $region25: #{tpu_custom_call.1} parent=1 // pred_fallthru
      _
    // Predicated region
    $region26: #{tpu_custom_call.1} parent=1 // pred_check
      _
    $region27: #{tpu_custom_call.1} parent=1 // pred_check_branch
      %61 = sbr.rel (0) target = $region29
    $region28: #{tpu_custom_call.1} parent=1 // pred_region
      %62 = dma.done [#allocation10], 4096
    $region29: #{tpu_custom_call.1} parent=1 // pred_fallthru
      _
    %s63 = smul.u32 0, 8
    %s64 = sld [smem:[#allocation5 + %s63]]
    %s65 = smul.addr %s64, 16
    %s66 = scalar_lea.hbm %s3, %s65
    // Predicated region
    $region30: #{tpu_custom_call.1} parent=1 // pred_check
      _
    $region31: #{tpu_custom_call.1} parent=1 // pred_check_branch
      %68 = sbr.rel target = $region33
    $region32: #{tpu_custom_call.1} parent=1 // pred_region
      %69 = sst [smem:[#allocation15]] [#allocation14]
      %70 = sst [smem:[#allocation16]] [#allocation13]
    $region33: #{tpu_custom_call.1} parent=1 // pred_fallthru
      _
    %72 = shalt.err (0)
    %s74 = sshll.u32 [#allocation2], 4
    %s75 = int_to_ptr.vmem [resolvable:$true] %s74
    %77 = dma.hbm_to_vmem [thread:$0]  %s66, 16, %s75, [#allocation3]
    %s78 = sadd.s32 %s63, 1
    %s79 = sld [smem:[#allocation5 + %s78]]
    %s80 = smul.addr %s79, 16
    %s81 = scalar_lea.hbm %s3, %s80
    %s82 = scalar_lea.vmem [#allocation2], 1
    %s83 = scalar_lea.sflag [#allocation3], 1
    // Predicated region
    $region34: #{tpu_custom_call.1} parent=1 // pred_check
      _
    $region35: #{tpu_custom_call.1} parent=1 // pred_check_branch
      %85 = sbr.rel target = $region37
    $region36: #{tpu_custom_call.1} parent=1 // pred_region
      %86 = sst [smem:[#allocation15]] [#allocation18]
      %87 = sst [smem:[#allocation16]] [#allocation17]
    $region37: #{tpu_custom_call.1} parent=1 // pred_fallthru
      _
    %89 = shalt.err (0)
    %s91 = sshll.u32 %s82, 4
    %s92 = int_to_ptr.vmem [resolvable:$true] %s91
    %94 = dma.hbm_to_vmem [thread:$0]  %s81, 16, %s92, %s83
    %s95 = sadd.s32 %s63, 2
    %s96 = sld [smem:[#allocation5 + %s95]]
    %s97 = smul.addr %s96, 16
    %s98 = scalar_lea.hbm %s3, %s97
    %s99 = scalar_lea.vmem [#allocation2], 2
    %s100 = scalar_lea.sflag [#allocation3], 2
    // Predicated region
    $region38: #{tpu_custom_call.1} parent=1 // pred_check
      _
    $region39: #{tpu_custom_call.1} parent=1 // pred_check_branch
      %102 = sbr.rel target = $region41
    $region40: #{tpu_custom_call.1} parent=1 // pred_region
      %103 = sst [smem:[#allocation15]] [#allocation20]
      %104 = sst [smem:[#allocation16]] [#allocation19]
    $region41: #{tpu_custom_call.1} parent=1 // pred_fallthru
      _
    %106 = shalt.err (0)
    %s108 = sshll.u32 %s99, 4
    %s109 = int_to_ptr.vmem [resolvable:$true] %s108
    %111 = dma.hbm_to_vmem [thread:$0]  %s98, 16, %s109, %s100
    %s112 = sadd.s32 %s63, 3
    %s113 = sld [smem:[#allocation5 + %s112]]
    %s114 = smul.addr %s113, 16
    %s115 = scalar_lea.hbm %s3, %s114
    %s116 = scalar_lea.vmem [#allocation2], 3
    %s117 = scalar_lea.sflag [#allocation3], 3
    // Predicated region
    $region42: #{tpu_custom_call.1} parent=1 // pred_check
      _
    $region43: #{tpu_custom_call.1} parent=1 // pred_check_branch
      %119 = sbr.rel target = $region45
    $region44: #{tpu_custom_call.1} parent=1 // pred_region
      %120 = sst [smem:[#allocation15]] [#allocation22]
      %121 = sst [smem:[#allocation16]] [#allocation21]
    $region45: #{tpu_custom_call.1} parent=1 // pred_fallthru
      _
    %123 = shalt.err (0)
    %s125 = sshll.u32 %s116, 4
    %s126 = int_to_ptr.vmem [resolvable:$true] %s125
    %128 = dma.hbm_to_vmem [thread:$0]  %s115, 16, %s126, %s117
    %s129 = sadd.s32 %s63, 4
    %s130 = sld [smem:[#allocation5 + %s129]]
    %s131 = smul.addr %s130, 16
    %s132 = scalar_lea.hbm %s3, %s131
    %s133 = scalar_lea.vmem [#allocation2], 4
    %s134 = scalar_lea.sflag [#allocation3], 4
    // Predicated region
    $region46: #{tpu_custom_call.1} parent=1 // pred_check
      _
    $region47: #{tpu_custom_call.1} parent=1 // pred_check_branch
      %136 = sbr.rel target = $region49
    $region48: #{tpu_custom_call.1} parent=1 // pred_region
      %137 = sst [smem:[#allocation15]] [#allocation24]
      %138 = sst [smem:[#allocation16]] [#allocation23]
    $region49: #{tpu_custom_call.1} parent=1 // pred_fallthru
      _
    %140 = shalt.err (0)
    %s142 = sshll.u32 %s133, 4
    %s143 = int_to_ptr.vmem [resolvable:$true] %s142
    %145 = dma.hbm_to_vmem [thread:$0]  %s132, 16, %s143, %s134
    %s146 = sadd.s32 %s63, 5
    %s147 = sld [smem:[#allocation5 + %s146]]
    %s148 = smul.addr %s147, 16
    %s149 = scalar_lea.hbm %s3, %s148
    %s150 = scalar_lea.vmem [#allocation2], 5
    %s151 = scalar_lea.sflag [#allocation3], 5
    // Predicated region
    $region50: #{tpu_custom_call.1} parent=1 // pred_check
      _
    $region51: #{tpu_custom_call.1} parent=1 // pred_check_branch
      %153 = sbr.rel target = $region53
    $region52: #{tpu_custom_call.1} parent=1 // pred_region
      %154 = sst [smem:[#allocation15]] [#allocation26]
      %155 = sst [smem:[#allocation16]] [#allocation25]
    $region53: #{tpu_custom_call.1} parent=1 // pred_fallthru
      _
    %157 = shalt.err (0)
    %s159 = sshll.u32 %s150, 4
    %s160 = int_to_ptr.vmem [resolvable:$true] %s159
    %162 = dma.hbm_to_vmem [thread:$0]  %s149, 16, %s160, %s151
    %s163 = sadd.s32 %s63, 6
    %s164 = sld [smem:[#allocation5 + %s163]]
    %s165 = smul.addr %s164, 16
    %s166 = scalar_lea.hbm %s3, %s165
    %s167 = scalar_lea.vmem [#allocation2], 6
    %s168 = scalar_lea.sflag [#allocation3], 6
    // Predicated region
    $region54: #{tpu_custom_call.1} parent=1 // pred_check
      _
    $region55: #{tpu_custom_call.1} parent=1 // pred_check_branch
      %170 = sbr.rel target = $region57
    $region56: #{tpu_custom_call.1} parent=1 // pred_region
      %171 = sst [smem:[#allocation15]] [#allocation28]
      %172 = sst [smem:[#allocation16]] [#allocation27]
    $region57: #{tpu_custom_call.1} parent=1 // pred_fallthru
      _
    %174 = shalt.err (0)
    %s176 = sshll.u32 %s167, 4
    %s177 = int_to_ptr.vmem [resolvable:$true] %s176
    %179 = dma.hbm_to_vmem [thread:$0]  %s166, 16, %s177, %s168
    %s180 = sadd.s32 %s63, 7
    %s181 = sld [smem:[#allocation5 + %s180]]
    %s182 = smul.addr %s181, 16
    %s183 = scalar_lea.hbm %s3, %s182
    %s184 = scalar_lea.vmem [#allocation2], 7
    %s185 = scalar_lea.sflag [#allocation3], 7
    // Predicated region
    $region58: #{tpu_custom_call.1} parent=1 // pred_check
      _
    $region59: #{tpu_custom_call.1} parent=1 // pred_check_branch
      %187 = sbr.rel target = $region61
    $region60: #{tpu_custom_call.1} parent=1 // pred_region
      %188 = sst [smem:[#allocation15]] [#allocation30]
      %189 = sst [smem:[#allocation16]] [#allocation29]
    $region61: #{tpu_custom_call.1} parent=1 // pred_fallthru
      _
    %191 = shalt.err (0)
    %s193 = sshll.u32 %s184, 4
    %s194 = int_to_ptr.vmem [resolvable:$true] %s193
    %196 = dma.hbm_to_vmem [thread:$0]  %s183, 16, %s194, %s185
    %v197 = vld [vmem:[#allocation6] sm:$0xff]
    %v198 = vld [vmem:[#allocation6 + $0x8] sm:$0xff]
    %v199 = vld [vmem:[#allocation6 + $0x10] sm:$0xff]
    %v200 = vld [vmem:[#allocation6 + $0x18] sm:$0xff]
    %v201 = vld [vmem:[#allocation6 + $0x20] sm:$0xff]
    %v202 = vld [vmem:[#allocation6 + $0x28] sm:$0xff]
    %v203 = vld [vmem:[#allocation6 + $0x30] sm:$0xff]
    %v204 = vld [vmem:[#allocation6 + $0x38] sm:$0xff]
    %v205 = vld [vmem:[#allocation9] sm:$0xff]
    %v206 = vld [vmem:[#allocation9 + $0x8] sm:$0xff]
    %v207 = vld [vmem:[#allocation9 + $0x10] sm:$0xff]
    %v208 = vld [vmem:[#allocation9 + $0x18] sm:$0xff]
    %v209 = vld [vmem:[#allocation9 + $0x20] sm:$0xff]
    %v210 = vld [vmem:[#allocation9 + $0x28] sm:$0xff]
    %v211 = vld [vmem:[#allocation9 + $0x30] sm:$0xff]
    %v212 = vld [vmem:[#allocation9 + $0x38] sm:$0xff]
    %v213 = vld [vmem:[#allocation9 + $0x40] sm:$0xff]
    %v214 = vld [vmem:[#allocation9 + $0x48] sm:$0xff]
    %v215 = vld [vmem:[#allocation9 + $0x50] sm:$0xff]
    %v216 = vld [vmem:[#allocation9 + $0x58] sm:$0xff]
    %v217 = vld [vmem:[#allocation9 + $0x60] sm:$0xff]
    %v218 = vld [vmem:[#allocation9 + $0x68] sm:$0xff]
    %v219 = vld [vmem:[#allocation9 + $0x70] sm:$0xff]
    %v220 = vld [vmem:[#allocation9 + $0x78] sm:$0xff]
    %v221 = vld [vmem:[#allocation9 + $0x80] sm:$0xff]
    %v222 = vld [vmem:[#allocation9 + $0x88] sm:$0xff]
    %v223 = vld [vmem:[#allocation9 + $0x90] sm:$0xff]
    %v224 = vld [vmem:[#allocation9 + $0x98] sm:$0xff]
    %v225 = vld [vmem:[#allocation9 + $0xa0] sm:$0xff]
    %v226 = vld [vmem:[#allocation9 + $0xa8] sm:$0xff]
    %v227 = vld [vmem:[#allocation9 + $0xb0] sm:$0xff]
    %v228 = vld [vmem:[#allocation9 + $0xb8] sm:$0xff]
    %v229 = vld [vmem:[#allocation9 + $0xc0] sm:$0xff]
    %v230 = vld [vmem:[#allocation9 + $0xc8] sm:$0xff]
    %v231 = vld [vmem:[#allocation9 + $0xd0] sm:$0xff]
    %v232 = vld [vmem:[#allocation9 + $0xd8] sm:$0xff]
    %v233 = vld [vmem:[#allocation9 + $0xe0] sm:$0xff]
    %v234 = vld [vmem:[#allocation9 + $0xe8] sm:$0xff]
    %v235 = vld [vmem:[#allocation9 + $0xf0] sm:$0xff]
    %v236 = vld [vmem:[#allocation9 + $0xf8] sm:$0xff]
    %v237 = vld [vmem:[#allocation9 + $0x100] sm:$0xff]
    %v238 = vld [vmem:[#allocation9 + $0x108] sm:$0xff]
    %v239 = vld [vmem:[#allocation9 + $0x110] sm:$0xff]
    %v240 = vld [vmem:[#allocation9 + $0x118] sm:$0xff]
    %v241 = vld [vmem:[#allocation9 + $0x120] sm:$0xff]
    %v242 = vld [vmem:[#allocation9 + $0x128] sm:$0xff]
    %v243 = vld [vmem:[#allocation9 + $0x130] sm:$0xff]
    %v244 = vld [vmem:[#allocation9 + $0x138] sm:$0xff]
    %v245 = vld [vmem:[#allocation9 + $0x140] sm:$0xff]
    %v246 = vld [vmem:[#allocation9 + $0x148] sm:$0xff]
    %v247 = vld [vmem:[#allocation9 + $0x150] sm:$0xff]
    %v248 = vld [vmem:[#allocation9 + $0x158] sm:$0xff]
    %v249 = vld [vmem:[#allocation9 + $0x160] sm:$0xff]
    %v250 = vld [vmem:[#allocation9 + $0x168] sm:$0xff]
    %v251 = vld [vmem:[#allocation9 + $0x170] sm:$0xff]
    %v252 = vld [vmem:[#allocation9 + $0x178] sm:$0xff]
    %v253 = vld [vmem:[#allocation9 + $0x180] sm:$0xff]
    %v254 = vld [vmem:[#allocation9 + $0x188] sm:$0xff]
    %v255 = vld [vmem:[#allocation9 + $0x190] sm:$0xff]
    %v256 = vld [vmem:[#allocation9 + $0x198] sm:$0xff]
    %v257 = vld [vmem:[#allocation9 + $0x1a0] sm:$0xff]
    %v258 = vld [vmem:[#allocation9 + $0x1a8] sm:$0xff]
    %v259 = vld [vmem:[#allocation9 + $0x1b0] sm:$0xff]
    %v260 = vld [vmem:[#allocation9 + $0x1b8] sm:$0xff]
    %v261 = vld [vmem:[#allocation9 + $0x1c0] sm:$0xff]
    %v262 = vld [vmem:[#allocation9 + $0x1c8] sm:$0xff]
    %v263 = vld [vmem:[#allocation9 + $0x1d0] sm:$0xff]
    %v264 = vld [vmem:[#allocation9 + $0x1d8] sm:$0xff]
    %v265 = vld [vmem:[#allocation9 + $0x1e0] sm:$0xff]
    %v266 = vld [vmem:[#allocation9 + $0x1e8] sm:$0xff]
    %v267 = vld [vmem:[#allocation9 + $0x1f0] sm:$0xff]
    %v268 = vld [vmem:[#allocation9 + $0x1f8] sm:$0xff]
    %v269 = vld [vmem:[#allocation9 + $0x200] sm:$0xff]
    %v270 = vld [vmem:[#allocation9 + $0x208] sm:$0xff]
    %v271 = vld [vmem:[#allocation9 + $0x210] sm:$0xff]
    %v272 = vld [vmem:[#allocation9 + $0x218] sm:$0xff]
    %v273 = vld [vmem:[#allocation9 + $0x220] sm:$0xff]
    %v274 = vld [vmem:[#allocation9 + $0x228] sm:$0xff]
    %v275 = vld [vmem:[#allocation9 + $0x230] sm:$0xff]
    %v276 = vld [vmem:[#allocation9 + $0x238] sm:$0xff]
    %v277 = vld [vmem:[#allocation9 + $0x240] sm:$0xff]
    %v278 = vld [vmem:[#allocation9 + $0x248] sm:$0xff]
    %v279 = vld [vmem:[#allocation9 + $0x250] sm:$0xff]
    %v280 = vld [vmem:[#allocation9 + $0x258] sm:$0xff]
    %v281 = vld [vmem:[#allocation9 + $0x260] sm:$0xff]
    %v282 = vld [vmem:[#allocation9 + $0x268] sm:$0xff]
    %v283 = vld [vmem:[#allocation9 + $0x270] sm:$0xff]
    %v284 = vld [vmem:[#allocation9 + $0x278] sm:$0xff]
    %v285 = vld [vmem:[#allocation9 + $0x280] sm:$0xff]
    %v286 = vld [vmem:[#allocation9 + $0x288] sm:$0xff]
    %v287 = vld [vmem:[#allocation9 + $0x290] sm:$0xff]
    %v288 = vld [vmem:[#allocation9 + $0x298] sm:$0xff]
    %v289 = vld [vmem:[#allocation9 + $0x2a0] sm:$0xff]
    %v290 = vld [vmem:[#allocation9 + $0x2a8] sm:$0xff]
    %v291 = vld [vmem:[#allocation9 + $0x2b0] sm:$0xff]
    %v292 = vld [vmem:[#allocation9 + $0x2b8] sm:$0xff]
    %v293 = vld [vmem:[#allocation9 + $0x2c0] sm:$0xff]
    %v294 = vld [vmem:[#allocation9 + $0x2c8] sm:$0xff]
    %v295 = vld [vmem:[#allocation9 + $0x2d0] sm:$0xff]
    %v296 = vld [vmem:[#allocation9 + $0x2d8] sm:$0xff]
    %v297 = vld [vmem:[#allocation9 + $0x2e0] sm:$0xff]
    %v298 = vld [vmem:[#allocation9 + $0x2e8] sm:$0xff]
    %v299 = vld [vmem:[#allocation9 + $0x2f0] sm:$0xff]
    %v300 = vld [vmem:[#allocation9 + $0x2f8] sm:$0xff]
    %v301 = vld [vmem:[#allocation9 + $0x300] sm:$0xff]
    %v302 = vld [vmem:[#allocation9 + $0x308] sm:$0xff]
    %v303 = vld [vmem:[#allocation9 + $0x310] sm:$0xff]
    %v304 = vld [vmem:[#allocation9 + $0x318] sm:$0xff]
    %v305 = vld [vmem:[#allocation9 + $0x320] sm:$0xff]
    %v306 = vld [vmem:[#allocation9 + $0x328] sm:$0xff]
    %v307 = vld [vmem:[#allocation9 + $0x330] sm:$0xff]
    %v308 = vld [vmem:[#allocation9 + $0x338] sm:$0xff]
    %v309 = vld [vmem:[#allocation9 + $0x340] sm:$0xff]
    %v310 = vld [vmem:[#allocation9 + $0x348] sm:$0xff]
    %v311 = vld [vmem:[#allocation9 + $0x350] sm:$0xff]
    %v312 = vld [vmem:[#allocation9 + $0x358] sm:$0xff]
    %v313 = vld [vmem:[#allocation9 + $0x360] sm:$0xff]
    %v314 = vld [vmem:[#allocation9 + $0x368] sm:$0xff]
    %v315 = vld [vmem:[#allocation9 + $0x370] sm:$0xff]
    %v316 = vld [vmem:[#allocation9 + $0x378] sm:$0xff]
    %v317 = vld [vmem:[#allocation9 + $0x380] sm:$0xff]
    %v318 = vld [vmem:[#allocation9 + $0x388] sm:$0xff]
    %v319 = vld [vmem:[#allocation9 + $0x390] sm:$0xff]
    %v320 = vld [vmem:[#allocation9 + $0x398] sm:$0xff]
    %v321 = vld [vmem:[#allocation9 + $0x3a0] sm:$0xff]
    %v322 = vld [vmem:[#allocation9 + $0x3a8] sm:$0xff]
    %v323 = vld [vmem:[#allocation9 + $0x3b0] sm:$0xff]
    %v324 = vld [vmem:[#allocation9 + $0x3b8] sm:$0xff]
    %v325 = vld [vmem:[#allocation9 + $0x3c0] sm:$0xff]
    %v326 = vld [vmem:[#allocation9 + $0x3c8] sm:$0xff]
    %v327 = vld [vmem:[#allocation9 + $0x3d0] sm:$0xff]
    %v328 = vld [vmem:[#allocation9 + $0x3d8] sm:$0xff]
    %v329 = vld [vmem:[#allocation9 + $0x3e0] sm:$0xff]
    %v330 = vld [vmem:[#allocation9 + $0x3e8] sm:$0xff]
    %v331 = vld [vmem:[#allocation9 + $0x3f0] sm:$0xff]
    %v332 = vld [vmem:[#allocation9 + $0x3f8] sm:$0xff]
    %v333 = vld [vmem:[%s5] sm:$0x1]
    %v334 = vlaneseq
    %v335 = vshrl.u32 %v334, 7
    %v336 = vsub.s32 0, %v335
    %v337 = vrot.slane %v333, %v336
    %338 = vmatprep.subr.mxu0 0.0
    %339 = vmatpush1.msra.mxu0 %v205
    %340 = vmatprep.subr.mxu0 0.0
    %341 = vmatpush1.msra.mxu0 %v206
    %342 = vmatprep.subr.mxu0 0.0
    %343 = vmatpush1.msra.mxu0 %v207
    %344 = vmatprep.subr.mxu0 0.0
    %345 = vmatpush1.msra.mxu0 %v208
    %346 = vmatprep.subr.mxu0 0.0
    %347 = vmatpush1.msra.mxu0 %v209
    %348 = vmatprep.subr.mxu0 0.0
    %349 = vmatpush1.msra.mxu0 %v210
    %350 = vmatprep.subr.mxu0 0.0
    %351 = vmatpush1.msra.mxu0 %v211
    %352 = vmatprep.subr.mxu0 0.0
    %353 = vmatpush1.msra.mxu0 %v212
    %354 = vmatprep.subr.mxu0 0.0
    %355 = vmatpush1.msra.mxu0 %v213
    %356 = vmatprep.subr.mxu0 0.0
    %357 = vmatpush1.msra.mxu0 %v214
    %358 = vmatprep.subr.mxu0 0.0
    %359 = vmatpush1.msra.mxu0 %v215
    %360 = vmatprep.subr.mxu0 0.0
    %361 = vmatpush1.msra.mxu0 %v216
    %362 = vmatprep.subr.mxu0 0.0
    %363 = vmatpush1.msra.mxu0 %v217
    %364 = vmatprep.subr.mxu0 0.0
    %365 = vmatpush1.msra.mxu0 %v218
    %366 = vmatprep.subr.mxu0 0.0
    %367 = vmatpush1.msra.mxu0 %v219
    %368 = vmatprep.subr.mxu0 0.0
    %369 = vmatpush1.msra.mxu0 %v220
    %370 = vmatprep.subr.mxu0 0.0
    %371 = vmatpush1.msra.mxu0 %v221
    %372 = vmatprep.subr.mxu0 0.0
    %373 = vmatpush1.msra.mxu0 %v222
    %374 = vmatprep.subr.mxu0 0.0
    %375 = vmatpush1.msra.mxu0 %v223
    %376 = vmatprep.subr.mxu0 0.0
    %377 = vmatpush1.msra.mxu0 %v224
    %378 = vmatprep.subr.mxu0 0.0
    %379 = vmatpush1.msra.mxu0 %v225
    %380 = vmatprep.subr.mxu0 0.0
    %381 = vmatpush1.msra.mxu0 %v226
    %382 = vmatprep.subr.mxu0 0.0
    %383 = vmatpush1.msra.mxu0 %v227
    %384 = vmatprep.subr.mxu0 0.0
    %385 = vmatpush1.msra.mxu0 %v228
    %386 = vmatprep.subr.mxu0 0.0
    %387 = vmatpush1.msra.mxu0 %v229
    %388 = vmatprep.subr.mxu0 0.0
    %389 = vmatpush1.msra.mxu0 %v230
    %390 = vmatprep.subr.mxu0 0.0
    %391 = vmatpush1.msra.mxu0 %v231
    %392 = vmatprep.subr.mxu0 0.0
    %393 = vmatpush1.msra.mxu0 %v232
    %394 = vmatprep.subr.mxu0 0.0
    %395 = vmatpush1.msra.mxu0 %v233
    %396 = vmatprep.subr.mxu0 0.0
    %397 = vmatpush1.msra.mxu0 %v234
    %398 = vmatprep.subr.mxu0 0.0
    %399 = vmatpush1.msra.mxu0 %v235
    %400 = vmatprep.subr.mxu0 0.0
    %401 = vmatpush1.msra.mxu0 %v236
    %402 = vmatprep.mubr.f32.mxu0 %v198
    %403 = vmatmul.mubr.f32.gmra.mrb[0].mxu0 %v197
    %v404 = vpop.f32.mrb[0].mxu0
    %v405 = vadd.f32 %v337, %v404
    %v406 = vpop.f32.mrb[0].mxu0
    %407 = vdwg.mxu0
    %408 = vmatprep.subr.mxu0 0.0
    %409 = vmatpush1.msra.mxu0 %v237
    %410 = vmatprep.subr.mxu0 0.0
    %411 = vmatpush1.msra.mxu0 %v238
    %412 = vmatprep.subr.mxu0 0.0
    %413 = vmatpush1.msra.mxu0 %v239
    %414 = vmatprep.subr.mxu0 0.0
    %415 = vmatpush1.msra.mxu0 %v240
    %416 = vmatprep.subr.mxu0 0.0
    %417 = vmatpush1.msra.mxu0 %v241
    %418 = vmatprep.subr.mxu0 0.0
    %419 = vmatpush1.msra.mxu0 %v242
    %420 = vmatprep.subr.mxu0 0.0
    %421 = vmatpush1.msra.mxu0 %v243
    %422 = vmatprep.subr.mxu0 0.0
    %423 = vmatpush1.msra.mxu0 %v244
    %424 = vmatprep.subr.mxu0 0.0
    %425 = vmatpush1.msra.mxu0 %v245
    %426 = vmatprep.subr.mxu0 0.0
    %427 = vmatpush1.msra.mxu0 %v246
    %428 = vmatprep.subr.mxu0 0.0
    %429 = vmatpush1.msra.mxu0 %v247
    %430 = vmatprep.subr.mxu0 0.0
    %431 = vmatpush1.msra.mxu0 %v248
    %432 = vmatprep.subr.mxu0 0.0
    %433 = vmatpush1.msra.mxu0 %v249
    %434 = vmatprep.subr.mxu0 0.0
    %435 = vmatpush1.msra.mxu0 %v250
    %436 = vmatprep.subr.mxu0 0.0
    %437 = vmatpush1.msra.mxu0 %v251
    %438 = vmatprep.subr.mxu0 0.0
    %439 = vmatpush1.msra.mxu0 %v252
    %440 = vmatprep.subr.mxu0 0.0
    %441 = vmatpush1.msra.mxu0 %v253
    %442 = vmatprep.subr.mxu0 0.0
    %443 = vmatpush1.msra.mxu0 %v254
    %444 = vmatprep.subr.mxu0 0.0
    %445 = vmatpush1.msra.mxu0 %v255
    %446 = vmatprep.subr.mxu0 0.0
    %447 = vmatpush1.msra.mxu0 %v256
    %448 = vmatprep.subr.mxu0 0.0
    %449 = vmatpush1.msra.mxu0 %v257
    %450 = vmatprep.subr.mxu0 0.0
    %451 = vmatpush1.msra.mxu0 %v258
    %452 = vmatprep.subr.mxu0 0.0
    %453 = vmatpush1.msra.mxu0 %v259
    %454 = vmatprep.subr.mxu0 0.0
    %455 = vmatpush1.msra.mxu0 %v260
    %456 = vmatprep.subr.mxu0 0.0
    %457 = vmatpush1.msra.mxu0 %v261
    %458 = vmatprep.subr.mxu0 0.0
    %459 = vmatpush1.msra.mxu0 %v262
    %460 = vmatprep.subr.mxu0 0.0
    %461 = vmatpush1.msra.mxu0 %v263
    %462 = vmatprep.subr.mxu0 0.0
    %463 = vmatpush1.msra.mxu0 %v264
    %464 = vmatprep.subr.mxu0 0.0
    %465 = vmatpush1.msra.mxu0 %v265
    %466 = vmatprep.subr.mxu0 0.0
    %467 = vmatpush1.msra.mxu0 %v266
    %468 = vmatprep.subr.mxu0 0.0
    %469 = vmatpush1.msra.mxu0 %v267
    %470 = vmatprep.subr.mxu0 0.0
    %471 = vmatpush1.msra.mxu0 %v268
    %472 = vmatprep.mubr.f32.mxu0 %v200
    %473 = vmatmul.mubr.f32.gmra.mrb[0].mxu0 %v199
    %v474 = vpop.f32.mrb[0].mxu0
    %v475 = vadd.f32 %v405, %v474
    %v476 = vpop.f32.mrb[0].mxu0
    %477 = vdwg.mxu0
    %478 = vmatprep.subr.mxu0 0.0
    %479 = vmatpush1.msra.mxu0 %v269
    %480 = vmatprep.subr.mxu0 0.0
    %481 = vmatpush1.msra.mxu0 %v270
    %482 = vmatprep.subr.mxu0 0.0
    %483 = vmatpush1.msra.mxu0 %v271
    %484 = vmatprep.subr.mxu0 0.0
    %485 = vmatpush1.msra.mxu0 %v272
    %486 = vmatprep.subr.mxu0 0.0
    %487 = vmatpush1.msra.mxu0 %v273
    %488 = vmatprep.subr.mxu0 0.0
    %489 = vmatpush1.msra.mxu0 %v274
    %490 = vmatprep.subr.mxu0 0.0
    %491 = vmatpush1.msra.mxu0 %v275
    %492 = vmatprep.subr.mxu0 0.0
    %493 = vmatpush1.msra.mxu0 %v276
    %494 = vmatprep.subr.mxu0 0.0
    %495 = vmatpush1.msra.mxu0 %v277
    %496 = vmatprep.subr.mxu0 0.0
    %497 = vmatpush1.msra.mxu0 %v278
    %498 = vmatprep.subr.mxu0 0.0
    %499 = vmatpush1.msra.mxu0 %v279
    %500 = vmatprep.subr.mxu0 0.0
    %501 = vmatpush1.msra.mxu0 %v280
    %502 = vmatprep.subr.mxu0 0.0
    %503 = vmatpush1.msra.mxu0 %v281
    %504 = vmatprep.subr.mxu0 0.0
    %505 = vmatpush1.msra.mxu0 %v282
    %506 = vmatprep.subr.mxu0 0.0
    %507 = vmatpush1.msra.mxu0 %v283
    %508 = vmatprep.subr.mxu0 0.0
    %509 = vmatpush1.msra.mxu0 %v284
    %510 = vmatprep.subr.mxu0 0.0
    %511 = vmatpush1.msra.mxu0 %v285
    %512 = vmatprep.subr.mxu0 0.0
    %513 = vmatpush1.msra.mxu0 %v286
    %514 = vmatprep.subr.mxu0 0.0
    %515 = vmatpush1.msra.mxu0 %v287
    %516 = vmatprep.subr.mxu0 0.0
    %517 = vmatpush1.msra.mxu0 %v288
    %518 = vmatprep.subr.mxu0 0.0
    %519 = vmatpush1.msra.mxu0 %v289
    %520 = vmatprep.subr.mxu0 0.0
    %521 = vmatpush1.msra.mxu0 %v290
    %522 = vmatprep.subr.mxu0 0.0
    %523 = vmatpush1.msra.mxu0 %v291
    %524 = vmatprep.subr.mxu0 0.0
    %525 = vmatpush1.msra.mxu0 %v292
    %526 = vmatprep.subr.mxu0 0.0
    %527 = vmatpush1.msra.mxu0 %v293
    %528 = vmatprep.subr.mxu0 0.0
    %529 = vmatpush1.msra.mxu0 %v294
    %530 = vmatprep.subr.mxu0 0.0
    %531 = vmatpush1.msra.mxu0 %v295
    %532 = vmatprep.subr.mxu0 0.0
    %533 = vmatpush1.msra.mxu0 %v296
    %534 = vmatprep.subr.mxu0 0.0
    %535 = vmatpush1.msra.mxu0 %v297
    %536 = vmatprep.subr.mxu0 0.0
    %537 = vmatpush1.msra.mxu0 %v298
    %538 = vmatprep.subr.mxu0 0.0
    %539 = vmatpush1.msra.mxu0 %v299
    %540 = vmatprep.subr.mxu0 0.0
    %541 = vmatpush1.msra.mxu0 %v300
    %542 = vmatprep.mubr.f32.mxu0 %v202
    %543 = vmatmul.mubr.f32.gmra.mrb[0].mxu0 %v201
    %v544 = vpop.f32.mrb[0].mxu0
    %v545 = vadd.f32 %v475, %v544
    %v546 = vpop.f32.mrb[0].mxu0
    %547 = vdwg.mxu0
    %548 = vmatprep.subr.mxu0 0.0
    %549 = vmatpush1.msra.mxu0 %v301
    %550 = vmatprep.subr.mxu0 0.0
    %551 = vmatpush1.msra.mxu0 %v302
    %552 = vmatprep.subr.mxu0 0.0
    %553 = vmatpush1.msra.mxu0 %v303
    %554 = vmatprep.subr.mxu0 0.0
    %555 = vmatpush1.msra.mxu0 %v304
    %556 = vmatprep.subr.mxu0 0.0
    %557 = vmatpush1.msra.mxu0 %v305
    %558 = vmatprep.subr.mxu0 0.0
    %559 = vmatpush1.msra.mxu0 %v306
    %560 = vmatprep.subr.mxu0 0.0
    %561 = vmatpush1.msra.mxu0 %v307
    %562 = vmatprep.subr.mxu0 0.0
    %563 = vmatpush1.msra.mxu0 %v308
    %564 = vmatprep.subr.mxu0 0.0
    %565 = vmatpush1.msra.mxu0 %v309
    %566 = vmatprep.subr.mxu0 0.0
    %567 = vmatpush1.msra.mxu0 %v310
    %568 = vmatprep.subr.mxu0 0.0
    %569 = vmatpush1.msra.mxu0 %v311
    %570 = vmatprep.subr.mxu0 0.0
    %571 = vmatpush1.msra.mxu0 %v312
    %572 = vmatprep.subr.mxu0 0.0
    %573 = vmatpush1.msra.mxu0 %v313
    %574 = vmatprep.subr.mxu0 0.0
    %575 = vmatpush1.msra.mxu0 %v314
    %576 = vmatprep.subr.mxu0 0.0
    %577 = vmatpush1.msra.mxu0 %v315
    %578 = vmatprep.subr.mxu0 0.0
    %579 = vmatpush1.msra.mxu0 %v316
    %580 = vmatprep.subr.mxu0 0.0
    %581 = vmatpush1.msra.mxu0 %v317
    %582 = vmatprep.subr.mxu0 0.0
    %583 = vmatpush1.msra.mxu0 %v318
    %584 = vmatprep.subr.mxu0 0.0
    %585 = vmatpush1.msra.mxu0 %v319
    %586 = vmatprep.subr.mxu0 0.0
    %587 = vmatpush1.msra.mxu0 %v320
    %588 = vmatprep.subr.mxu0 0.0
    %589 = vmatpush1.msra.mxu0 %v321
    %590 = vmatprep.subr.mxu0 0.0
    %591 = vmatpush1.msra.mxu0 %v322
    %592 = vmatprep.subr.mxu0 0.0
    %593 = vmatpush1.msra.mxu0 %v323
    %594 = vmatprep.subr.mxu0 0.0
    %595 = vmatpush1.msra.mxu0 %v324
    %596 = vmatprep.subr.mxu0 0.0
    %597 = vmatpush1.msra.mxu0 %v325
    %598 = vmatprep.subr.mxu0 0.0
    %599 = vmatpush1.msra.mxu0 %v326
    %600 = vmatprep.subr.mxu0 0.0
    %601 = vmatpush1.msra.mxu0 %v327
    %602 = vmatprep.subr.mxu0 0.0
    %603 = vmatpush1.msra.mxu0 %v328
    %604 = vmatprep.subr.mxu0 0.0
    %605 = vmatpush1.msra.mxu0 %v329
    %606 = vmatprep.subr.mxu0 0.0
    %607 = vmatpush1.msra.mxu0 %v330
    %608 = vmatprep.subr.mxu0 0.0
    %609 = vmatpush1.msra.mxu0 %v331
    %610 = vmatprep.subr.mxu0 0.0
    %611 = vmatpush1.msra.mxu0 %v332
    %612 = vmatprep.mubr.f32.mxu0 %v204
    %613 = vmatmul.mubr.f32.gmra.mrb[0].mxu0 %v203
    %v614 = vpop.f32.mrb[0].mxu0
    %v615 = vadd.f32 %v545, %v614
    %v616 = vpop.f32.mrb[0].mxu0
    %617 = vdwg.mxu0
    %v618 = vtanh.pop %v615
    %620 = dma.done [#allocation3], 16
    %622 = dma.done %s83, 16
    %624 = dma.done %s100, 16
    %626 = dma.done %s117, 16
    %628 = dma.done %s134, 16
    %630 = dma.done %s151, 16
    %632 = dma.done %s168, 16
    %634 = dma.done %s185, 16
    %v635 = vld [vmem:[#allocation2] sm:$0xff]
    %v636 = vld [vmem:[%s5 + $0x1] sm:$0x1]
    %v637 = vlaneseq
    %v638 = vshrl.u32 %v637, 7
    %v639 = vsub.s32 0, %v638
    %v640 = vrot.slane %v636, %v639
    %v641 = vadd.f32 %v635, %v640
    %v642 = vtanh.pop %v641
    %v643 = vld [vmem:[#allocation11] sm:$0xff]
    %v644 = vld [vmem:[#allocation11 + $0x8] sm:$0xff]
    %v645 = vld [vmem:[#allocation11 + $0x10] sm:$0xff]
    %v646 = vld [vmem:[#allocation11 + $0x18] sm:$0xff]
    %v647 = vld [vmem:[#allocation11 + $0x20] sm:$0xff]
    %v648 = vld [vmem:[#allocation11 + $0x28] sm:$0xff]
    %v649 = vld [vmem:[#allocation11 + $0x30] sm:$0xff]
    %v650 = vld [vmem:[#allocation11 + $0x38] sm:$0xff]
    %v651 = vld [vmem:[#allocation11 + $0x40] sm:$0xff]
    %v652 = vld [vmem:[#allocation11 + $0x48] sm:$0xff]
    %v653 = vld [vmem:[#allocation11 + $0x50] sm:$0xff]
    %v654 = vld [vmem:[#allocation11 + $0x58] sm:$0xff]
    %v655 = vld [vmem:[#allocation11 + $0x60] sm:$0xff]
    %v656 = vld [vmem:[#allocation11 + $0x68] sm:$0xff]
    %v657 = vld [vmem:[#allocation11 + $0x70] sm:$0xff]
    %v658 = vld [vmem:[#allocation11 + $0x78] sm:$0xff]
    %v659 = vld [vmem:[#allocation11 + $0x80] sm:$0xff]
    %v660 = vld [vmem:[#allocation11 + $0x88] sm:$0xff]
    %v661 = vld [vmem:[#allocation11 + $0x90] sm:$0xff]
    %v662 = vld [vmem:[#allocation11 + $0x98] sm:$0xff]
    %v663 = vld [vmem:[#allocation11 + $0xa0] sm:$0xff]
    %v664 = vld [vmem:[#allocation11 + $0xa8] sm:$0xff]
    %v665 = vld [vmem:[#allocation11 + $0xb0] sm:$0xff]
    %v666 = vld [vmem:[#allocation11 + $0xb8] sm:$0xff]
    %v667 = vld [vmem:[#allocation11 + $0xc0] sm:$0xff]
    %v668 = vld [vmem:[#allocation11 + $0xc8] sm:$0xff]
    %v669 = vld [vmem:[#allocation11 + $0xd0] sm:$0xff]
    %v670 = vld [vmem:[#allocation11 + $0xd8] sm:$0xff]
    %v671 = vld [vmem:[#allocation11 + $0xe0] sm:$0xff]
    %v672 = vld [vmem:[#allocation11 + $0xe8] sm:$0xff]
    %v673 = vld [vmem:[#allocation11 + $0xf0] sm:$0xff]
    %v674 = vld [vmem:[#allocation11 + $0xf8] sm:$0xff]
    %v675 = vld [vmem:[%s5 + $0x2] sm:$0x1]
    %v676 = vlaneseq
    %v677 = vshrl.u32 %v676, 7
    %v678 = vsub.s32 0, %v677
    %v679 = vrot.slane %v675, %v678
    %680 = vmatprep.subr.mxu0 0.0
    %681 = vmatpush1.msra.mxu0 %v643
    %682 = vmatprep.subr.mxu0 0.0
    %683 = vmatpush1.msra.mxu0 %v644
    %684 = vmatprep.subr.mxu0 0.0
    %685 = vmatpush1.msra.mxu0 %v645
    %686 = vmatprep.subr.mxu0 0.0
    %687 = vmatpush1.msra.mxu0 %v646
    %688 = vmatprep.subr.mxu0 0.0
    %689 = vmatpush1.msra.mxu0 %v647
    %690 = vmatprep.subr.mxu0 0.0
    %691 = vmatpush1.msra.mxu0 %v648
    %692 = vmatprep.subr.mxu0 0.0
    %693 = vmatpush1.msra.mxu0 %v649
    %694 = vmatprep.subr.mxu0 0.0
    %695 = vmatpush1.msra.mxu0 %v650
    %696 = vmatprep.subr.mxu0 0.0
    %697 = vmatpush1.msra.mxu0 %v651
    %698 = vmatprep.subr.mxu0 0.0
    %699 = vmatpush1.msra.mxu0 %v652
    %700 = vmatprep.subr.mxu0 0.0
    %701 = vmatpush1.msra.mxu0 %v653
    %702 = vmatprep.subr.mxu0 0.0
    %703 = vmatpush1.msra.mxu0 %v654
    %704 = vmatprep.subr.mxu0 0.0
    %705 = vmatpush1.msra.mxu0 %v655
    %706 = vmatprep.subr.mxu0 0.0
    %707 = vmatpush1.msra.mxu0 %v656
    %708 = vmatprep.subr.mxu0 0.0
    %709 = vmatpush1.msra.mxu0 %v657
    %710 = vmatprep.subr.mxu0 0.0
    %711 = vmatpush1.msra.mxu0 %v658
    %712 = vmatprep.subr.mxu0 0.0
    %713 = vmatpush1.msra.mxu0 %v659
    %714 = vmatprep.subr.mxu0 0.0
    %715 = vmatpush1.msra.mxu0 %v660
    %716 = vmatprep.subr.mxu0 0.0
    %717 = vmatpush1.msra.mxu0 %v661
    %718 = vmatprep.subr.mxu0 0.0
    %719 = vmatpush1.msra.mxu0 %v662
    %720 = vmatprep.subr.mxu0 0.0
    %721 = vmatpush1.msra.mxu0 %v663
    %722 = vmatprep.subr.mxu0 0.0
    %723 = vmatpush1.msra.mxu0 %v664
    %724 = vmatprep.subr.mxu0 0.0
    %725 = vmatpush1.msra.mxu0 %v665
    %726 = vmatprep.subr.mxu0 0.0
    %727 = vmatpush1.msra.mxu0 %v666
    %728 = vmatprep.subr.mxu0 0.0
    %729 = vmatpush1.msra.mxu0 %v667
    %730 = vmatprep.subr.mxu0 0.0
    %731 = vmatpush1.msra.mxu0 %v668
    %732 = vmatprep.subr.mxu0 0.0
    %733 = vmatpush1.msra.mxu0 %v669
    %734 = vmatprep.subr.mxu0 0.0
    %735 = vmatpush1.msra.mxu0 %v670
    %736 = vmatprep.subr.mxu0 0.0
    %737 = vmatpush1.msra.mxu0 %v671
    %738 = vmatprep.subr.mxu0 0.0
    %739 = vmatpush1.msra.mxu0 %v672
    %740 = vmatprep.subr.mxu0 0.0
    %741 = vmatpush1.msra.mxu0 %v673
    %742 = vmatprep.subr.mxu0 0.0
    %743 = vmatpush1.msra.mxu0 %v674
    %744 = vmatprep.mubr.f32.mxu0 %v642
    %745 = vmatmul.mubr.f32.gmra.mrb[0].mxu0 %v618
    %v746 = vpop.f32.mrb[0].mxu0
    %v747 = vadd.f32 %v679, %v746
    %v748 = vpop.f32.mrb[0].mxu0
    %749 = vdwg.mxu0
    %750 = vst [vmem:[#allocation12] sm:$0xff] %v747
    // Predicated region
    $region62: #{tpu_custom_call.1} parent=1 // pred_check
      _
    $region63: #{tpu_custom_call.1} parent=1 // pred_check_branch
      %752 = sbr.rel (0) target = $region65
    $region64: #{tpu_custom_call.1} parent=1 // pred_region
      %s754 = ssub.s32 128, 128
      %755 = vsyncadd [#allocation8], %s754
      %s757 = sshll.u32 [#allocation12], 4
      %s758 = int_to_ptr.vmem [resolvable:$true] %s757
      %760 = dma.vmem_to_hbm [thread:$0]  %s758, 128, %s6, [#allocation8]
    $region65: #{tpu_custom_call.1} parent=1 // pred_fallthru
      _
    // Predicated region
    $region66: #{tpu_custom_call.1} parent=1 // pred_check
      _
    $region67: #{tpu_custom_call.1} parent=1 // pred_check_branch
      %762 = sbr.rel (0) target = $region69
    $region68: #{tpu_custom_call.1} parent=1 // pred_region
      %763 = dma.done [#allocation8], 128
    $region69: #{tpu_custom_call.1} parent=1 // pred_fallthru
      _
    %764 = vsyncpa [#allocation7], 1
    %765 = vsyncpa [#allocation10], 1
    %766 = vsyncpa [#allocation8], 1
  %767 = vsyncmov [#allocation3]
  %s768 = vpop.sfrf %767
  %p769 = scmp.eq.s32.totalorder %s768, 0
  %p770 = pneg %p769
  %772 = shalt.err (%p770)
  %s773 = scalar_lea.sflag [#allocation3], 1
  %774 = vsyncmov %s773
  %s775 = vpop.sfrf %774
  %p776 = scmp.eq.s32.totalorder %s775, 0
  %p777 = pneg %p776
  %779 = shalt.err (%p777)
  %s780 = scalar_lea.sflag [#allocation3], 2
  %781 = vsyncmov %s780
  %s782 = vpop.sfrf %781
  %p783 = scmp.eq.s32.totalorder %s782, 0
  %p784 = pneg %p783
  %786 = shalt.err (%p784)
  %s787 = scalar_lea.sflag [#allocation3], 3
  %788 = vsyncmov %s787
  %s789 = vpop.sfrf %788
  %p790 = scmp.eq.s32.totalorder %s789, 0
  %p791 = pneg %p790
  %793 = shalt.err (%p791)
  %s794 = scalar_lea.sflag [#allocation3], 4
  %795 = vsyncmov %s794
  %s796 = vpop.sfrf %795
  %p797 = scmp.eq.s32.totalorder %s796, 0
  %p798 = pneg %p797
  %800 = shalt.err (%p798)
  %s801 = scalar_lea.sflag [#allocation3], 5
  %802 = vsyncmov %s801
  %s803 = vpop.sfrf %802
  %p804 = scmp.eq.s32.totalorder %s803, 0
  %p805 = pneg %p804
  %807 = shalt.err (%p805)
  %s808 = scalar_lea.sflag [#allocation3], 6
  %809 = vsyncmov %s808
  %s810 = vpop.sfrf %809
  %p811 = scmp.eq.s32.totalorder %s810, 0
  %p812 = pneg %p811
  %814 = shalt.err (%p812)
  %s815 = scalar_lea.sflag [#allocation3], 7
  %816 = vsyncmov %s815
  %s817 = vpop.sfrf %816
  %p818 = scmp.eq.s32.totalorder %s817, 0
  %p819 = pneg %p818
  %821 = shalt.err (%p819)

</llo_original>
